<compile_context>
chip_gen: v7x
topology: tpu7x:2x2x1
jax: 0.10.0
libtpu: 0.0.40
codegen_flags: <defaults>
</compile_context>

<pallas_src>
import functools
import math

import jax
import jax.numpy as jnp
from jax.experimental import pallas as pl
from jax.experimental.pallas import tpu as pltpu

LN_EPS = 1e-5
NEG_INF = -1e9


def _layer_norm(x, gamma, beta):
    # x: (N, C) f32; gamma/beta: (1, C) f32
    mean = jnp.mean(x, axis=-1, keepdims=True)
    var = jnp.mean((x - mean) * (x - mean), axis=-1, keepdims=True)
    return (x - mean) * jax.lax.rsqrt(var + LN_EPS) * gamma + beta


def _gelu(x):
    # TODO(synk): PyTorch nn.GELU defaults to erf; the tanh approximation is
    # used for robust Mosaic lowering (<1e-3 relative difference).
    c = math.sqrt(2.0 / math.pi)
    return 0.5 * x * (1.0 + jnp.tanh(c * (x + 0.044715 * x * x * x)))


def vaq_layer_kernel(
    x_ref, mask_ref,
    ln1_g_ref, ln1_b_ref,
    wqkv_ref, bqkv_ref,
    wproj_ref, bproj_ref,
    ln2_g_ref, ln2_b_ref,
    w1_ref, b1_ref, w2_ref, b2_ref,
    out_ref,
    *, n_heads, weights_resident,
):
    d = pl.program_id(1)

    # Depth axis is sequential; the activation lives in the resident output
    # block.  Initialize it from the input only on the first block.
    @pl.when(d == 0)
    def _():
        out_ref[...] = x_ref[...]

    Bt, L, C = out_ref.shape
    N = Bt * L
    H = n_heads
    Dh = C // H

    # Large weights are either resident for the whole grid (index with d) or
    # streamed one depth-slice at a time (leading dim 1 -> static index 0).
    wd = d if weights_resident else 0

    x2 = out_ref[...].reshape(N, C)          # result of blocks [0, d), f32
    # Hoisted key-padding-mask broadcast (JAX does not CSE broadcast_in_dim,
    # so do it once per depth step, not once per head).
    mask_b = jnp.broadcast_to(mask_ref[...], (Bt, L, L))

    # ---------------- attention branch ----------------
    xn = _layer_norm(x2, ln1_g_ref[d], ln1_b_ref[d]).astype(jnp.bfloat16)
    # Single full-width QKV projection; 1/sqrt(Dh) is baked into the Q columns.
    qkv = jnp.dot(xn, wqkv_ref[wd],
                  preferred_element_type=jnp.float32) + bqkv_ref[d]   # (N, 3C)

    # TODO(synk): for very large n_heads convert this static unroll into a
    # lax.fori_loop; the per-iteration live set is now only one head's s/p/ctx.
    ctx_parts = []
    for h in range(H):
        q3 = qkv[:, h * Dh:(h + 1) * Dh].reshape(Bt, L, Dh).astype(jnp.bfloat16)
        k3 = qkv[:, C + h * Dh:C + (h + 1) * Dh].reshape(Bt, L, Dh).astype(jnp.bfloat16)
        v3 = qkv[:, 2 * C + h * Dh:2 * C + (h + 1) * Dh].reshape(Bt, L, Dh).astype(jnp.bfloat16)

        s = jnp.einsum('bqd,bkd->bqk', q3, k3,
                       preferred_element_type=jnp.float32) + mask_b   # (Bt, L, L)
        m = jnp.max(s, axis=-1, keepdims=True)
        e = jnp.exp(s - m)
        denom = jnp.sum(e, axis=-1, keepdims=True)
        # approx reciprocal runs on the EUP; ~1e-3-level relative error vs the
        # exact PyTorch softmax (acceptable for inference).
        p = (e * pl.reciprocal(denom, approx=True)).astype(jnp.bfloat16)
        ctx_parts.append(
            jnp.einsum('bqk,bkd->bqd', p, v3,
                       preferred_element_type=jnp.float32).astype(jnp.bfloat16))

    # Head merge (natural concat order) -> one full-width output projection.
    ctx = jnp.concatenate(ctx_parts, axis=-1).reshape(N, C)           # (N, C) bf16
    attn = jnp.dot(ctx, wproj_ref[wd],
                   preferred_element_type=jnp.float32) + bproj_ref[d]
    x2 = x2 + attn

    # ---------------- MLP branch ----------------
    xn2 = _layer_norm(x2, ln2_g_ref[d], ln2_b_ref[d]).astype(jnp.bfloat16)
    h1 = jnp.dot(xn2, w1_ref[wd],
                 preferred_element_type=jnp.float32) + b1_ref[d]
    h1 = _gelu(h1).astype(jnp.bfloat16)
    x2 = x2 + (jnp.dot(h1, w2_ref[wd],
                       preferred_element_type=jnp.float32) + b2_ref[d])

    out_ref[...] = x2.reshape(Bt, L, C)


def init_block_params(key, n_channels, mlp_ratio):
    """Natural (PyTorch-like) per-block parameter layout, f32."""
    C = n_channels
    hidden = int(C * mlp_ratio)
    ks = jax.random.split(key, 4)
    s = 0.02
    return {
        "ln1_g": jnp.ones((1, C), jnp.float32),
        "ln1_b": jnp.zeros((1, C), jnp.float32),
        "wqkv": s * jax.random.normal(ks[0], (C, 3 * C), jnp.float32),
        "bqkv": jnp.zeros((1, 3 * C), jnp.float32),
        "wproj": s * jax.random.normal(ks[1], (C, C), jnp.float32),
        "bproj": jnp.zeros((1, C), jnp.float32),
        "ln2_g": jnp.ones((1, C), jnp.float32),
        "ln2_b": jnp.zeros((1, C), jnp.float32),
        "w1": s * jax.random.normal(ks[2], (C, hidden), jnp.float32),
        "b1": jnp.zeros((1, hidden), jnp.float32),
        "w2": s * jax.random.normal(ks[3], (hidden, C), jnp.float32),
        "b2": jnp.zeros((1, C), jnp.float32),
    }


def pack_layer_params(blocks_params, n_heads):
    """Wrapper-side re-layout: qk scale folded into the Q columns of the fused
    QKV weight/bias, bf16 weights, depth-stacking for the fused kernel."""
    C = blocks_params[0]["wqkv"].shape[0]
    Dh = C // n_heads
    scale = Dh ** -0.5
    qscale = jnp.concatenate(
        [jnp.full((C,), scale, jnp.float32), jnp.ones((2 * C,), jnp.float32)])

    keys = ["ln1_g", "ln1_b", "wqkv", "bqkv", "wproj", "bproj",
            "ln2_g", "ln2_b", "w1", "b1", "w2", "b2"]
    packed = {k: [] for k in keys}
    for p in blocks_params:
        packed["ln1_g"].append(p["ln1_g"])
        packed["ln1_b"].append(p["ln1_b"])
        packed["wqkv"].append((p["wqkv"] * qscale[None, :]).astype(jnp.bfloat16))
        packed["bqkv"].append(p["bqkv"] * qscale[None, :])
        packed["wproj"].append(p["wproj"].astype(jnp.bfloat16))
        packed["bproj"].append(p["bproj"])
        packed["ln2_g"].append(p["ln2_g"])
        packed["ln2_b"].append(p["ln2_b"])
        packed["w1"].append(p["w1"].astype(jnp.bfloat16))
        packed["b1"].append(p["b1"])
        packed["w2"].append(p["w2"].astype(jnp.bfloat16))
        packed["b2"].append(p["b2"])
    return {k: jnp.stack(v, axis=0) for k, v in packed.items()}


def _vmem_limit_bytes():
    """~3/4 of physical VMEM (96 MiB on v5e/v6e, 48 MiB on v7x), capped."""
    try:
        cap = int(pltpu.get_tpu_info().vmem_capacity_bytes)
    except Exception:
        cap = 128 * 1024 * 1024
    return max(32 * 1024 * 1024, min(cap * 3 // 4, 100 * 1024 * 1024))


def basic_vaq_layer_apply(tvq, add_mask, packed, n_heads, *, batch_block=None):
    B, L, C = tvq.shape
    depth = packed["wqkv"].shape[0]
    hidden = packed["w1"].shape[2]
    H = n_heads
    assert C % H == 0
    assert L % 8 == 0, "pad the token axis to a multiple of 8 in the wrapper"

    vmem_limit = _vmem_limit_bytes()

    # Keep the big weight matrices VMEM-resident for the whole grid when they
    # fit comfortably (counting potential double buffering); otherwise stream
    # one depth-slice per grid step.
    big = ("wqkv", "wproj", "w1", "w2")
    weight_bytes = sum(int(packed[k].size) * packed[k].dtype.itemsize for k in big)
    weights_resident = 2 * weight_bytes <= vmem_limit // 3

    if batch_block is None:
        # ~1024 matmul rows per step amortizes weight streaming and the
        # ~0.35us/step grid overhead; keep >=2 batch blocks so the 'parallel'
        # axis can shard across v7x's 2 TensorCores.
        target_rows = 1024
        cap = max(1, target_rows // max(L, 1))
        if B >= 2:
            cap = min(cap, max(1, B // 2))
        cap = max(1, min(cap, B))
        batch_block = 1
        for cand in range(cap, 0, -1):
            if B % cand == 0:
                batch_block = cand
                break
    Bt = batch_block
    assert B % Bt == 0
    grid = (B // Bt, depth)

    def batch_spec(shape):
        return pl.BlockSpec((Bt,) + shape[1:],
                            lambda b, d: (b,) + (0,) * (len(shape) - 1))

    def resident_spec(shape):
        # Full array, constant block index -> fetched once, resident for the
        # whole grid; kernel indexes the depth axis with program_id(1).
        return pl.BlockSpec(shape, lambda b, d: (0,) * len(shape))

    def stream_spec(shape):
        return pl.BlockSpec((1,) + shape[1:],
                            lambda b, d: (d,) + (0,) * (len(shape) - 1))

    def weight_spec(shape):
        return resident_spec(shape) if weights_resident else stream_spec(shape)

    in_specs = [
        batch_spec(tvq.shape),
        batch_spec(add_mask.shape),
        resident_spec(packed["ln1_g"].shape), resident_spec(packed["ln1_b"].shape),
        weight_spec(packed["wqkv"].shape), resident_spec(packed["bqkv"].shape),
        weight_spec(packed["wproj"].shape), resident_spec(packed["bproj"].shape),
        resident_spec(packed["ln2_g"].shape), resident_spec(packed["ln2_b"].shape),
        weight_spec(packed["w1"].shape), resident_spec(packed["b1"].shape),
        weight_spec(packed["w2"].shape), resident_spec(packed["b2"].shape),
    ]
    out_spec = pl.BlockSpec((Bt, L, C), lambda b, d: (b, 0, 0))

    # Advisory cost estimate for the XLA scheduler.
    flops = int(depth * B * L * (2 * C * (4 * C + 2 * hidden) + 4 * L * C))
    transcendentals = int(depth * B * L * (H * L + hidden))
    streams = 1 if weights_resident else (B // Bt)
    bytes_accessed = int(tvq.size * 4 * 2 + streams * weight_bytes
                         + sum(int(v.size) * v.dtype.itemsize
                               for k, v in packed.items() if k not in big))

    # TODO(synk): on v7x (64 MiB VMEM/TC) with production C/hidden, add an
    # inner 'arbitrary' grid axis tiling the MLP hidden dim so double-buffered
    # w1/w2 stay bounded while keeping DMA/compute overlap.
    kernel = functools.partial(vaq_layer_kernel, n_heads=n_heads,
                               weights_resident=weights_resident)
    return pl.pallas_call(
        kernel,
        out_shape=jax.ShapeDtypeStruct((B, L, C), jnp.float32),
        grid=grid,
        in_specs=in_specs,
        out_specs=out_spec,
        compiler_params=pltpu.CompilerParams(
            dimension_semantics=("parallel", "arbitrary"),
            vmem_limit_bytes=vmem_limit),
        cost_estimate=pl.CostEstimate(
            flops=flops,
            transcendentals=transcendentals,
            bytes_accessed=bytes_accessed),
    )(
        tvq, add_mask,
        packed["ln1_g"], packed["ln1_b"],
        packed["wqkv"], packed["bqkv"],
        packed["wproj"], packed["bproj"],
        packed["ln2_g"], packed["ln2_b"],
        packed["w1"], packed["b1"], packed["w2"], packed["b2"],
    )


def basic_vaq_layer_forward(tvq, patch_resolution, rgb_mask, tquery_mask,
                            blocks_params, n_heads):
    """Mirrors BasicVaQLayer.forward (eval mode: dropout/drop-path = 0)."""
    B, Ph, Pw = rgb_mask.shape
    L0 = tvq.shape[1]
    # init_vq_mask: (B, Ph*Pw) ++ (B, Nq) combined key-padding mask (True=masked).
    vq_mask = jnp.concatenate(
        [rgb_mask.reshape(B, Ph * Pw), tquery_mask], axis=-1)          # (B, L0)

    # Pad the token axis to a multiple of 8: layout-free (N,C)<->(Bt,L,C)
    # reshapes and denser vregs.  Padded keys are masked, padded rows dropped.
    # TODO(synk): pad to 128 at production L for fully lane-dense score tiles.
    L = ((L0 + 7) // 8) * 8
    if L != L0:
        tvq = jnp.pad(tvq, ((0, 0), (0, L - L0), (0, 0)))
        vq_mask = jnp.pad(vq_mask, ((0, 0), (0, L - L0)), constant_values=True)
    # Rows whose keys are ALL masked get a uniform softmax here (PyTorch MHA
    # would produce NaN); intentional, matches the previous implementation.
    add_mask = jnp.where(vq_mask, NEG_INF, 0.0).astype(jnp.float32)[:, None, :]

    packed = pack_layer_params(blocks_params, n_heads)
    out_tvq = basic_vaq_layer_apply(tvq, add_mask, packed, n_heads)
    if L != L0:
        out_tvq = out_tvq[:, :L0, :]
    return {"patch_resolution": patch_resolution, "output_tvq": out_tvq}


if __name__ == "__main__":
    # Small, module-consistent shapes.
    B = 2
    n_channels = 32
    n_heads = 4
    depth = 2
    mlp_ratio = 4.0
    Ph, Pw = 4, 4
    n_queries = 8
    L = Ph * Pw + n_queries          # 24 tokens

    key = jax.random.PRNGKey(0)
    k_tvq, k_rgb, k_q, k_params = jax.random.split(key, 4)

    tvq = jax.random.normal(k_tvq, (B, L, n_channels), jnp.float32)
    # padding masks: True = masked.  Keep plenty of tokens unmasked.
    rgb_mask = jax.random.uniform(k_rgb, (B, Ph, Pw)) > 0.8
    tquery_mask = jax.random.uniform(k_q, (B, n_queries)) > 0.7

    block_keys = jax.random.split(k_params, depth)
    blocks_params = [init_block_params(bk, n_channels, mlp_ratio)
                     for bk in block_keys]

    out = basic_vaq_layer_forward(
        tvq, [Ph, Pw], rgb_mask, tquery_mask, blocks_params, n_heads)
    res = jax.block_until_ready(out["output_tvq"])

    assert res.shape == (B, L, n_channels)
    assert bool(jnp.all(jnp.isfinite(res)))
    assert out["patch_resolution"] == [Ph, Pw]
    print("KERNEL_OK")
</pallas_src>

<mosaic_0001>
module attributes {stable_mosaic.version = 11 : i64} {
  func.func @vaq_layer_kernel(%arg0: i32, %arg1: i32, %arg2: memref<1x24x32xf32, #tpu.memory_space<vmem>>, %arg3: memref<1x1x24xf32, #tpu.memory_space<vmem>>, %arg4: memref<2x1x32xf32, #tpu.memory_space<vmem>>, %arg5: memref<2x1x32xf32, #tpu.memory_space<vmem>>, %arg6: memref<2x32x96xbf16, #tpu.memory_space<vmem>>, %arg7: memref<2x1x96xf32, #tpu.memory_space<vmem>>, %arg8: memref<2x32x32xbf16, #tpu.memory_space<vmem>>, %arg9: memref<2x1x32xf32, #tpu.memory_space<vmem>>, %arg10: memref<2x1x32xf32, #tpu.memory_space<vmem>>, %arg11: memref<2x1x32xf32, #tpu.memory_space<vmem>>, %arg12: memref<2x32x128xbf16, #tpu.memory_space<vmem>>, %arg13: memref<2x1x128xf32, #tpu.memory_space<vmem>>, %arg14: memref<2x128x32xbf16, #tpu.memory_space<vmem>>, %arg15: memref<2x1x32xf32, #tpu.memory_space<vmem>>, %arg16: memref<1x24x32xf32, #tpu.memory_space<vmem>>) attributes {dimension_semantics = [#tpu.dimension_semantics<parallel>, #tpu.dimension_semantics<arbitrary>], iteration_bounds = array<i64: 2, 2>, scalar_prefetch = 0 : i64, scratch_operands = 0 : i64, tpu.core_type = #tpu.core_type<tc>, window_params = [{transform_indices = @transform_0, window_bounds = array<i64: 1, 24, 32>}, {transform_indices = @transform_1, window_bounds = array<i64: 1, 1, 24>}, {pipeline_mode = #tpu.pipeline_mode<synchronous>, transform_indices = @transform_2, window_bounds = array<i64: 2, 1, 32>}, {pipeline_mode = #tpu.pipeline_mode<synchronous>, transform_indices = @transform_3, window_bounds = array<i64: 2, 1, 32>}, {pipeline_mode = #tpu.pipeline_mode<synchronous>, transform_indices = @transform_4, window_bounds = array<i64: 2, 32, 96>}, {pipeline_mode = #tpu.pipeline_mode<synchronous>, transform_indices = @transform_5, window_bounds = array<i64: 2, 1, 96>}, {pipeline_mode = #tpu.pipeline_mode<synchronous>, transform_indices = @transform_6, window_bounds = array<i64: 2, 32, 32>}, {pipeline_mode = #tpu.pipeline_mode<synchronous>, transform_indices = @transform_7, window_bounds = array<i64: 2, 1, 32>}, {pipeline_mode = #tpu.pipeline_mode<synchronous>, transform_indices = @transform_8, window_bounds = array<i64: 2, 1, 32>}, {pipeline_mode = #tpu.pipeline_mode<synchronous>, transform_indices = @transform_9, window_bounds = array<i64: 2, 1, 32>}, {pipeline_mode = #tpu.pipeline_mode<synchronous>, transform_indices = @transform_10, window_bounds = array<i64: 2, 32, 128>}, {pipeline_mode = #tpu.pipeline_mode<synchronous>, transform_indices = @transform_11, window_bounds = array<i64: 2, 1, 128>}, {pipeline_mode = #tpu.pipeline_mode<synchronous>, transform_indices = @transform_12, window_bounds = array<i64: 2, 128, 32>}, {pipeline_mode = #tpu.pipeline_mode<synchronous>, transform_indices = @transform_13, window_bounds = array<i64: 2, 1, 32>}, {transform_indices = @transform_14, window_bounds = array<i64: 1, 24, 32>}]} {
    %c0_i32 = arith.constant 0 : i32
    %0 = arith.cmpi eq, %arg1, %c0_i32 : i32
    %1 = arith.extui %0 : i1 to i32
    %c0_i32_0 = arith.constant 0 : i32
    %2 = arith.cmpi ne, %1, %c0_i32_0 : i32
    scf.if %2 {
      %c0_66 = arith.constant 0 : index
      %c0_67 = arith.constant 0 : index
      %c0_68 = arith.constant 0 : index
      %222 = vector.load %arg2[%c0_66, %c0_67, %c0_68] : memref<1x24x32xf32, #tpu.memory_space<vmem>>, vector<1x24x32xf32>
      %c0_69 = arith.constant 0 : index
      %c0_70 = arith.constant 0 : index
      %c0_71 = arith.constant 0 : index
      %223 = vector.load %arg16[%c0_69, %c0_70, %c0_71] : memref<1x24x32xf32, #tpu.memory_space<vmem>>, vector<1x24x32xf32>
      tpu.vector_store %arg16[%c0_69, %c0_70, %c0_71], %222 {strides = array<i32>} : memref<1x24x32xf32, #tpu.memory_space<vmem>>, vector<1x24x32xf32>,
    } else {
    }
    %c0 = arith.constant 0 : index
    %c0_1 = arith.constant 0 : index
    %c0_2 = arith.constant 0 : index
    %3 = vector.load %arg16[%c0, %c0_1, %c0_2] : memref<1x24x32xf32, #tpu.memory_space<vmem>>, vector<1x24x32xf32>
    %4 = vector.shape_cast %3 : vector<1x24x32xf32> to vector<24x32xf32>
    %c0_3 = arith.constant 0 : index
    %c0_4 = arith.constant 0 : index
    %c0_5 = arith.constant 0 : index
    %5 = vector.load %arg3[%c0_3, %c0_4, %c0_5] : memref<1x1x24xf32, #tpu.memory_space<vmem>>, vector<1x1x24xf32>
    %6 = vector.shape_cast %5 : vector<1x1x24xf32> to vector<1x1x24xf32>
    %7 = vector.broadcast %6 : vector<1x1x24xf32> to vector<1x24x24xf32>
    %8 = arith.index_cast %arg1 : i32 to index
    %c0_6 = arith.constant 0 : index
    %c0_7 = arith.constant 0 : index
    %9 = vector.load %arg4[%8, %c0_6, %c0_7] : memref<2x1x32xf32, #tpu.memory_space<vmem>>, vector<1x1x32xf32>
    %10 = vector.shape_cast %9 : vector<1x1x32xf32> to vector<1x32xf32>
    %11 = arith.index_cast %arg1 : i32 to index
    %c0_8 = arith.constant 0 : index
    %c0_9 = arith.constant 0 : index
    %12 = vector.load %arg5[%11, %c0_8, %c0_9] : memref<2x1x32xf32, #tpu.memory_space<vmem>>, vector<1x1x32xf32>
    %13 = vector.shape_cast %12 : vector<1x1x32xf32> to vector<1x32xf32>
    %cst = arith.constant dense<0.000000e+00> : vector<24xf32>
    %14 = vector.multi_reduction <add>, %4, %cst [1] : vector<24x32xf32> to vector<24xf32>
    %15 = vector.shape_cast %14 : vector<24xf32> to vector<24x1xf32>
    %cst_10 = arith.constant 3.200000e+01 : f32
    %16 = vector.broadcast %cst_10 : f32 to vector<24x1xf32>
    %17 = arith.divf %15, %16 : vector<24x1xf32>
    %18 = vector.broadcast %17 : vector<24x1xf32> to vector<24x32xf32>
    %19 = arith.subf %4, %18 : vector<24x32xf32>
    %20 = vector.broadcast %17 : vector<24x1xf32> to vector<24x32xf32>
    %21 = arith.subf %4, %20 : vector<24x32xf32>
    %22 = arith.mulf %19, %21 : vector<24x32xf32>
    %cst_11 = arith.constant dense<0.000000e+00> : vector<24xf32>
    %23 = vector.multi_reduction <add>, %22, %cst_11 [1] : vector<24x32xf32> to vector<24xf32>
    %24 = vector.shape_cast %23 : vector<24xf32> to vector<24x1xf32>
    %cst_12 = arith.constant 3.200000e+01 : f32
    %25 = vector.broadcast %cst_12 : f32 to vector<24x1xf32>
    %26 = arith.divf %24, %25 : vector<24x1xf32>
    %27 = vector.broadcast %17 : vector<24x1xf32> to vector<24x32xf32>
    %28 = arith.subf %4, %27 : vector<24x32xf32>
    %cst_13 = arith.constant 9.99999974E-6 : f32
    %29 = vector.broadcast %cst_13 : f32 to vector<24x1xf32>
    %30 = arith.addf %26, %29 : vector<24x1xf32>
    %31 = math.rsqrt %30 : vector<24x1xf32>
    %32 = vector.broadcast %31 : vector<24x1xf32> to vector<24x32xf32>
    %33 = arith.mulf %28, %32 : vector<24x32xf32>
    %34 = vector.broadcast %10 : vector<1x32xf32> to vector<24x32xf32>
    %35 = arith.mulf %33, %34 : vector<24x32xf32>
    %36 = vector.broadcast %13 : vector<1x32xf32> to vector<24x32xf32>
    %37 = arith.addf %35, %36 : vector<24x32xf32>
    %38 = arith.truncf %37 : vector<24x32xf32> to vector<24x32xbf16>
    %39 = arith.index_cast %arg1 : i32 to index
    %c0_14 = arith.constant 0 : index
    %c0_15 = arith.constant 0 : index
    %40 = vector.load %arg6[%39, %c0_14, %c0_15] : memref<2x32x96xbf16, #tpu.memory_space<vmem>>, vector<1x32x96xbf16>
    %41 = vector.shape_cast %40 : vector<1x32x96xbf16> to vector<32x96xbf16>
    %cst_16 = arith.constant dense<0.000000e+00> : vector<24x96xf32>
    %42 = tpu.matmul %38, %41, %cst_16 {dimension_numbers = #tpu.dot_dimension_numbers<[1], [0], [0], [1], [0, 0, 1, 1], [], []>} : vector<24x32xbf16>, vector<32x96xbf16>, vector<24x96xf32> -> vector<24x96xf32>
    %43 = arith.index_cast %arg1 : i32 to index
    %c0_17 = arith.constant 0 : index
    %c0_18 = arith.constant 0 : index
    %44 = vector.load %arg7[%43, %c0_17, %c0_18] : memref<2x1x96xf32, #tpu.memory_space<vmem>>, vector<1x1x96xf32>
    %45 = vector.shape_cast %44 : vector<1x1x96xf32> to vector<1x96xf32>
    %46 = vector.broadcast %45 : vector<1x96xf32> to vector<24x96xf32>
    %47 = arith.addf %42, %46 : vector<24x96xf32>
    %48 = vector.extract_strided_slice %47 {offsets = [0, 0], sizes = [24, 8], strides = [1, 1]} : vector<24x96xf32> to vector<24x8xf32>
    %49 = vector.shape_cast %48 : vector<24x8xf32> to vector<1x24x8xf32>
    %50 = arith.truncf %49 : vector<1x24x8xf32> to vector<1x24x8xbf16>
    %51 = vector.extract_strided_slice %47 {offsets = [0, 32], sizes = [24, 8], strides = [1, 1]} : vector<24x96xf32> to vector<24x8xf32>
    %52 = vector.shape_cast %51 : vector<24x8xf32> to vector<1x24x8xf32>
    %53 = arith.truncf %52 : vector<1x24x8xf32> to vector<1x24x8xbf16>
    %54 = vector.extract_strided_slice %47 {offsets = [0, 64], sizes = [24, 8], strides = [1, 1]} : vector<24x96xf32> to vector<24x8xf32>
    %55 = vector.shape_cast %54 : vector<24x8xf32> to vector<1x24x8xf32>
    %56 = arith.truncf %55 : vector<1x24x8xf32> to vector<1x24x8xbf16>
    "tpu.trace_start"() <{level = 10 : i32, message = "bqd,bkd->bqk"}> : () -> ()
    %cst_19 = arith.constant dense<0.000000e+00> : vector<1x24x24xf32>
    %57 = tpu.matmul %50, %53, %cst_19 {dimension_numbers = #tpu.dot_dimension_numbers<[2], [2], [1], [1], [0, 0, 0, 1, 1, 1], [0], [0]>} : vector<1x24x8xbf16>, vector<1x24x8xbf16>, vector<1x24x24xf32> -> vector<1x24x24xf32>
    "tpu.trace_stop"() : () -> ()
    %58 = arith.addf %57, %7 : vector<1x24x24xf32>
    %cst_20 = arith.constant dense<0xFF800000> : vector<1x24xf32>
    %59 = vector.multi_reduction <maximumf>, %58, %cst_20 [2] : vector<1x24x24xf32> to vector<1x24xf32>
    %60 = vector.shape_cast %59 : vector<1x24xf32> to vector<1x24x1xf32>
    %61 = vector.broadcast %60 : vector<1x24x1xf32> to vector<1x24x24xf32>
    %62 = arith.subf %58, %61 : vector<1x24x24xf32>
    %63 = math.exp %62 : vector<1x24x24xf32>
    %cst_21 = arith.constant dense<0.000000e+00> : vector<1x24xf32>
    %64 = vector.multi_reduction <add>, %63, %cst_21 [2] : vector<1x24x24xf32> to vector<1x24xf32>
    %65 = vector.shape_cast %64 : vector<1x24xf32> to vector<1x24x1xf32>
    %66 = tpu.reciprocal %65 {approx = true} : vector<1x24x1xf32> -> vector<1x24x1xf32>
    %67 = vector.broadcast %66 : vector<1x24x1xf32> to vector<1x24x24xf32>
    %68 = arith.mulf %63, %67 : vector<1x24x24xf32>
    %69 = arith.truncf %68 : vector<1x24x24xf32> to vector<1x24x24xbf16>
    "tpu.trace_start"() <{level = 10 : i32, message = "bqk,bkd->bqd"}> : () -> ()
    %cst_22 = arith.constant dense<0.000000e+00> : vector<1x24x8xf32>
    %70 = tpu.matmul %69, %56, %cst_22 {dimension_numbers = #tpu.dot_dimension_numbers<[2], [1], [1], [2], [0, 0, 0, 1, 1, 2], [0], [0]>} : vector<1x24x24xbf16>, vector<1x24x8xbf16>, vector<1x24x8xf32> -> vector<1x24x8xf32>
    "tpu.trace_stop"() : () -> ()
    %71 = arith.truncf %70 : vector<1x24x8xf32> to vector<1x24x8xbf16>
    %72 = vector.extract_strided_slice %47 {offsets = [0, 8], sizes = [24, 8], strides = [1, 1]} : vector<24x96xf32> to vector<24x8xf32>
    %73 = vector.shape_cast %72 : vector<24x8xf32> to vector<1x24x8xf32>
    %74 = arith.truncf %73 : vector<1x24x8xf32> to vector<1x24x8xbf16>
    %75 = vector.extract_strided_slice %47 {offsets = [0, 40], sizes = [24, 8], strides = [1, 1]} : vector<24x96xf32> to vector<24x8xf32>
    %76 = vector.shape_cast %75 : vector<24x8xf32> to vector<1x24x8xf32>
    %77 = arith.truncf %76 : vector<1x24x8xf32> to vector<1x24x8xbf16>
    %78 = vector.extract_strided_slice %47 {offsets = [0, 72], sizes = [24, 8], strides = [1, 1]} : vector<24x96xf32> to vector<24x8xf32>
    %79 = vector.shape_cast %78 : vector<24x8xf32> to vector<1x24x8xf32>
    %80 = arith.truncf %79 : vector<1x24x8xf32> to vector<1x24x8xbf16>
    "tpu.trace_start"() <{level = 10 : i32, message = "bqd,bkd->bqk"}> : () -> ()
    %cst_23 = arith.constant dense<0.000000e+00> : vector<1x24x24xf32>
    %81 = tpu.matmul %74, %77, %cst_23 {dimension_numbers = #tpu.dot_dimension_numbers<[2], [2], [1], [1], [0, 0, 0, 1, 1, 1], [0], [0]>} : vector<1x24x8xbf16>, vector<1x24x8xbf16>, vector<1x24x24xf32> -> vector<1x24x24xf32>
    "tpu.trace_stop"() : () -> ()
    %82 = arith.addf %81, %7 : vector<1x24x24xf32>
    %cst_24 = arith.constant dense<0xFF800000> : vector<1x24xf32>
    %83 = vector.multi_reduction <maximumf>, %82, %cst_24 [2] : vector<1x24x24xf32> to vector<1x24xf32>
    %84 = vector.shape_cast %83 : vector<1x24xf32> to vector<1x24x1xf32>
    %85 = vector.broadcast %84 : vector<1x24x1xf32> to vector<1x24x24xf32>
    %86 = arith.subf %82, %85 : vector<1x24x24xf32>
    %87 = math.exp %86 : vector<1x24x24xf32>
    %cst_25 = arith.constant dense<0.000000e+00> : vector<1x24xf32>
    %88 = vector.multi_reduction <add>, %87, %cst_25 [2] : vector<1x24x24xf32> to vector<1x24xf32>
    %89 = vector.shape_cast %88 : vector<1x24xf32> to vector<1x24x1xf32>
    %90 = tpu.reciprocal %89 {approx = true} : vector<1x24x1xf32> -> vector<1x24x1xf32>
    %91 = vector.broadcast %90 : vector<1x24x1xf32> to vector<1x24x24xf32>
    %92 = arith.mulf %87, %91 : vector<1x24x24xf32>
    %93 = arith.truncf %92 : vector<1x24x24xf32> to vector<1x24x24xbf16>
    "tpu.trace_start"() <{level = 10 : i32, message = "bqk,bkd->bqd"}> : () -> ()
    %cst_26 = arith.constant dense<0.000000e+00> : vector<1x24x8xf32>
    %94 = tpu.matmul %93, %80, %cst_26 {dimension_numbers = #tpu.dot_dimension_numbers<[2], [1], [1], [2], [0, 0, 0, 1, 1, 2], [0], [0]>} : vector<1x24x24xbf16>, vector<1x24x8xbf16>, vector<1x24x8xf32> -> vector<1x24x8xf32>
    "tpu.trace_stop"() : () -> ()
    %95 = arith.truncf %94 : vector<1x24x8xf32> to vector<1x24x8xbf16>
    %96 = vector.extract_strided_slice %47 {offsets = [0, 16], sizes = [24, 8], strides = [1, 1]} : vector<24x96xf32> to vector<24x8xf32>
    %97 = vector.shape_cast %96 : vector<24x8xf32> to vector<1x24x8xf32>
    %98 = arith.truncf %97 : vector<1x24x8xf32> to vector<1x24x8xbf16>
    %99 = vector.extract_strided_slice %47 {offsets = [0, 48], sizes = [24, 8], strides = [1, 1]} : vector<24x96xf32> to vector<24x8xf32>
    %100 = vector.shape_cast %99 : vector<24x8xf32> to vector<1x24x8xf32>
    %101 = arith.truncf %100 : vector<1x24x8xf32> to vector<1x24x8xbf16>
    %102 = vector.extract_strided_slice %47 {offsets = [0, 80], sizes = [24, 8], strides = [1, 1]} : vector<24x96xf32> to vector<24x8xf32>
    %103 = vector.shape_cast %102 : vector<24x8xf32> to vector<1x24x8xf32>
    %104 = arith.truncf %103 : vector<1x24x8xf32> to vector<1x24x8xbf16>
    "tpu.trace_start"() <{level = 10 : i32, message = "bqd,bkd->bqk"}> : () -> ()
    %cst_27 = arith.constant dense<0.000000e+00> : vector<1x24x24xf32>
    %105 = tpu.matmul %98, %101, %cst_27 {dimension_numbers = #tpu.dot_dimension_numbers<[2], [2], [1], [1], [0, 0, 0, 1, 1, 1], [0], [0]>} : vector<1x24x8xbf16>, vector<1x24x8xbf16>, vector<1x24x24xf32> -> vector<1x24x24xf32>
    "tpu.trace_stop"() : () -> ()
    %106 = arith.addf %105, %7 : vector<1x24x24xf32>
    %cst_28 = arith.constant dense<0xFF800000> : vector<1x24xf32>
    %107 = vector.multi_reduction <maximumf>, %106, %cst_28 [2] : vector<1x24x24xf32> to vector<1x24xf32>
    %108 = vector.shape_cast %107 : vector<1x24xf32> to vector<1x24x1xf32>
    %109 = vector.broadcast %108 : vector<1x24x1xf32> to vector<1x24x24xf32>
    %110 = arith.subf %106, %109 : vector<1x24x24xf32>
    %111 = math.exp %110 : vector<1x24x24xf32>
    %cst_29 = arith.constant dense<0.000000e+00> : vector<1x24xf32>
    %112 = vector.multi_reduction <add>, %111, %cst_29 [2] : vector<1x24x24xf32> to vector<1x24xf32>
    %113 = vector.shape_cast %112 : vector<1x24xf32> to vector<1x24x1xf32>
    %114 = tpu.reciprocal %113 {approx = true} : vector<1x24x1xf32> -> vector<1x24x1xf32>
    %115 = vector.broadcast %114 : vector<1x24x1xf32> to vector<1x24x24xf32>
    %116 = arith.mulf %111, %115 : vector<1x24x24xf32>
    %117 = arith.truncf %116 : vector<1x24x24xf32> to vector<1x24x24xbf16>
    "tpu.trace_start"() <{level = 10 : i32, message = "bqk,bkd->bqd"}> : () -> ()
    %cst_30 = arith.constant dense<0.000000e+00> : vector<1x24x8xf32>
    %118 = tpu.matmul %117, %104, %cst_30 {dimension_numbers = #tpu.dot_dimension_numbers<[2], [1], [1], [2], [0, 0, 0, 1, 1, 2], [0], [0]>} : vector<1x24x24xbf16>, vector<1x24x8xbf16>, vector<1x24x8xf32> -> vector<1x24x8xf32>
    "tpu.trace_stop"() : () -> ()
    %119 = arith.truncf %118 : vector<1x24x8xf32> to vector<1x24x8xbf16>
    %120 = vector.extract_strided_slice %47 {offsets = [0, 24], sizes = [24, 8], strides = [1, 1]} : vector<24x96xf32> to vector<24x8xf32>
    %121 = vector.shape_cast %120 : vector<24x8xf32> to vector<1x24x8xf32>
    %122 = arith.truncf %121 : vector<1x24x8xf32> to vector<1x24x8xbf16>
    %123 = vector.extract_strided_slice %47 {offsets = [0, 56], sizes = [24, 8], strides = [1, 1]} : vector<24x96xf32> to vector<24x8xf32>
    %124 = vector.shape_cast %123 : vector<24x8xf32> to vector<1x24x8xf32>
    %125 = arith.truncf %124 : vector<1x24x8xf32> to vector<1x24x8xbf16>
    %126 = vector.extract_strided_slice %47 {offsets = [0, 88], sizes = [24, 8], strides = [1, 1]} : vector<24x96xf32> to vector<24x8xf32>
    %127 = vector.shape_cast %126 : vector<24x8xf32> to vector<1x24x8xf32>
    %128 = arith.truncf %127 : vector<1x24x8xf32> to vector<1x24x8xbf16>
    "tpu.trace_start"() <{level = 10 : i32, message = "bqd,bkd->bqk"}> : () -> ()
    %cst_31 = arith.constant dense<0.000000e+00> : vector<1x24x24xf32>
    %129 = tpu.matmul %122, %125, %cst_31 {dimension_numbers = #tpu.dot_dimension_numbers<[2], [2], [1], [1], [0, 0, 0, 1, 1, 1], [0], [0]>} : vector<1x24x8xbf16>, vector<1x24x8xbf16>, vector<1x24x24xf32> -> vector<1x24x24xf32>
    "tpu.trace_stop"() : () -> ()
    %130 = arith.addf %129, %7 : vector<1x24x24xf32>
    %cst_32 = arith.constant dense<0xFF800000> : vector<1x24xf32>
    %131 = vector.multi_reduction <maximumf>, %130, %cst_32 [2] : vector<1x24x24xf32> to vector<1x24xf32>
    %132 = vector.shape_cast %131 : vector<1x24xf32> to vector<1x24x1xf32>
    %133 = vector.broadcast %132 : vector<1x24x1xf32> to vector<1x24x24xf32>
    %134 = arith.subf %130, %133 : vector<1x24x24xf32>
    %135 = math.exp %134 : vector<1x24x24xf32>
    %cst_33 = arith.constant dense<0.000000e+00> : vector<1x24xf32>
    %136 = vector.multi_reduction <add>, %135, %cst_33 [2] : vector<1x24x24xf32> to vector<1x24xf32>
    %137 = vector.shape_cast %136 : vector<1x24xf32> to vector<1x24x1xf32>
    %138 = tpu.reciprocal %137 {approx = true} : vector<1x24x1xf32> -> vector<1x24x1xf32>
    %139 = vector.broadcast %138 : vector<1x24x1xf32> to vector<1x24x24xf32>
    %140 = arith.mulf %135, %139 : vector<1x24x24xf32>
    %141 = arith.truncf %140 : vector<1x24x24xf32> to vector<1x24x24xbf16>
    "tpu.trace_start"() <{level = 10 : i32, message = "bqk,bkd->bqd"}> : () -> ()
    %cst_34 = arith.constant dense<0.000000e+00> : vector<1x24x8xf32>
    %142 = tpu.matmul %141, %128, %cst_34 {dimension_numbers = #tpu.dot_dimension_numbers<[2], [1], [1], [2], [0, 0, 0, 1, 1, 2], [0], [0]>} : vector<1x24x24xbf16>, vector<1x24x8xbf16>, vector<1x24x8xf32> -> vector<1x24x8xf32>
    "tpu.trace_stop"() : () -> ()
    %143 = arith.truncf %142 : vector<1x24x8xf32> to vector<1x24x8xbf16>
    %144 = tpu.concatenate %71, %95, %119, %143 in 2 : vector<1x24x8xbf16>, vector<1x24x8xbf16>, vector<1x24x8xbf16>, vector<1x24x8xbf16> -> vector<1x24x32xbf16>
    %145 = vector.shape_cast %144 : vector<1x24x32xbf16> to vector<24x32xbf16>
    %146 = arith.index_cast %arg1 : i32 to index
    %c0_35 = arith.constant 0 : index
    %c0_36 = arith.constant 0 : index
    %147 = vector.load %arg8[%146, %c0_35, %c0_36] : memref<2x32x32xbf16, #tpu.memory_space<vmem>>, vector<1x32x32xbf16>
    %148 = vector.shape_cast %147 : vector<1x32x32xbf16> to vector<32x32xbf16>
    %cst_37 = arith.constant dense<0.000000e+00> : vector<24x32xf32>
    %149 = tpu.matmul %145, %148, %cst_37 {dimension_numbers = #tpu.dot_dimension_numbers<[1], [0], [0], [1], [0, 0, 1, 1], [], []>} : vector<24x32xbf16>, vector<32x32xbf16>, vector<24x32xf32> -> vector<24x32xf32>
    %150 = arith.index_cast %arg1 : i32 to index
    %c0_38 = arith.constant 0 : index
    %c0_39 = arith.constant 0 : index
    %151 = vector.load %arg9[%150, %c0_38, %c0_39] : memref<2x1x32xf32, #tpu.memory_space<vmem>>, vector<1x1x32xf32>
    %152 = vector.shape_cast %151 : vector<1x1x32xf32> to vector<1x32xf32>
    %153 = vector.broadcast %152 : vector<1x32xf32> to vector<24x32xf32>
    %154 = arith.addf %149, %153 : vector<24x32xf32>
    %155 = arith.addf %4, %154 : vector<24x32xf32>
    %156 = arith.index_cast %arg1 : i32 to index
    %c0_40 = arith.constant 0 : index
    %c0_41 = arith.constant 0 : index
    %157 = vector.load %arg10[%156, %c0_40, %c0_41] : memref<2x1x32xf32, #tpu.memory_space<vmem>>, vector<1x1x32xf32>
    %158 = vector.shape_cast %157 : vector<1x1x32xf32> to vector<1x32xf32>
    %159 = arith.index_cast %arg1 : i32 to index
    %c0_42 = arith.constant 0 : index
    %c0_43 = arith.constant 0 : index
    %160 = vector.load %arg11[%159, %c0_42, %c0_43] : memref<2x1x32xf32, #tpu.memory_space<vmem>>, vector<1x1x32xf32>
    %161 = vector.shape_cast %160 : vector<1x1x32xf32> to vector<1x32xf32>
    %cst_44 = arith.constant dense<0.000000e+00> : vector<24xf32>
    %162 = vector.multi_reduction <add>, %155, %cst_44 [1] : vector<24x32xf32> to vector<24xf32>
    %163 = vector.shape_cast %162 : vector<24xf32> to vector<24x1xf32>
    %cst_45 = arith.constant 3.200000e+01 : f32
    %164 = vector.broadcast %cst_45 : f32 to vector<24x1xf32>
    %165 = arith.divf %163, %164 : vector<24x1xf32>
    %166 = vector.broadcast %165 : vector<24x1xf32> to vector<24x32xf32>
    %167 = arith.subf %155, %166 : vector<24x32xf32>
    %168 = vector.broadcast %165 : vector<24x1xf32> to vector<24x32xf32>
    %169 = arith.subf %155, %168 : vector<24x32xf32>
    %170 = arith.mulf %167, %169 : vector<24x32xf32>
    %cst_46 = arith.constant dense<0.000000e+00> : vector<24xf32>
    %171 = vector.multi_reduction <add>, %170, %cst_46 [1] : vector<24x32xf32> to vector<24xf32>
    %172 = vector.shape_cast %171 : vector<24xf32> to vector<24x1xf32>
    %cst_47 = arith.constant 3.200000e+01 : f32
    %173 = vector.broadcast %cst_47 : f32 to vector<24x1xf32>
    %174 = arith.divf %172, %173 : vector<24x1xf32>
    %175 = vector.broadcast %165 : vector<24x1xf32> to vector<24x32xf32>
    %176 = arith.subf %155, %175 : vector<24x32xf32>
    %cst_48 = arith.constant 9.99999974E-6 : f32
    %177 = vector.broadcast %cst_48 : f32 to vector<24x1xf32>
    %178 = arith.addf %174, %177 : vector<24x1xf32>
    %179 = math.rsqrt %178 : vector<24x1xf32>
    %180 = vector.broadcast %179 : vector<24x1xf32> to vector<24x32xf32>
    %181 = arith.mulf %176, %180 : vector<24x32xf32>
    %182 = vector.broadcast %158 : vector<1x32xf32> to vector<24x32xf32>
    %183 = arith.mulf %181, %182 : vector<24x32xf32>
    %184 = vector.broadcast %161 : vector<1x32xf32> to vector<24x32xf32>
    %185 = arith.addf %183, %184 : vector<24x32xf32>
    %186 = arith.truncf %185 : vector<24x32xf32> to vector<24x32xbf16>
    %187 = arith.index_cast %arg1 : i32 to index
    %c0_49 = arith.constant 0 : index
    %c0_50 = arith.constant 0 : index
    %188 = vector.load %arg12[%187, %c0_49, %c0_50] : memref<2x32x128xbf16, #tpu.memory_space<vmem>>, vector<1x32x128xbf16>
    %189 = vector.shape_cast %188 : vector<1x32x128xbf16> to vector<32x128xbf16>
    %cst_51 = arith.constant dense<0.000000e+00> : vector<24x128xf32>
    %190 = tpu.matmul %186, %189, %cst_51 {dimension_numbers = #tpu.dot_dimension_numbers<[1], [0], [0], [1], [0, 0, 1, 1], [], []>} : vector<24x32xbf16>, vector<32x128xbf16>, vector<24x128xf32> -> vector<24x128xf32>
    %191 = arith.index_cast %arg1 : i32 to index
    %c0_52 = arith.constant 0 : index
    %c0_53 = arith.constant 0 : index
    %192 = vector.load %arg13[%191, %c0_52, %c0_53] : memref<2x1x128xf32, #tpu.memory_space<vmem>>, vector<1x1x128xf32>
    %193 = vector.shape_cast %192 : vector<1x1x128xf32> to vector<1x128xf32>
    %194 = vector.broadcast %193 : vector<1x128xf32> to vector<24x128xf32>
    %195 = arith.addf %190, %194 : vector<24x128xf32>
    %cst_54 = arith.constant 5.000000e-01 : f32
    %196 = vector.broadcast %cst_54 : f32 to vector<24x128xf32>
    %197 = arith.mulf %196, %195 : vector<24x128xf32>
    %cst_55 = arith.constant 4.471500e-02 : f32
    %198 = vector.broadcast %cst_55 : f32 to vector<24x128xf32>
    %199 = arith.mulf %198, %195 : vector<24x128xf32>
    %200 = arith.mulf %199, %195 : vector<24x128xf32>
    %201 = arith.mulf %200, %195 : vector<24x128xf32>
    %202 = arith.addf %195, %201 : vector<24x128xf32>
    %cst_56 = arith.constant 0.797884583 : f32
    %203 = vector.broadcast %cst_56 : f32 to vector<24x128xf32>
    %204 = arith.mulf %203, %202 : vector<24x128xf32>
    %205 = math.tanh %204 : vector<24x128xf32>
    %cst_57 = arith.constant 1.000000e+00 : f32
    %206 = vector.broadcast %cst_57 : f32 to vector<24x128xf32>
    %207 = arith.addf %206, %205 : vector<24x128xf32>
    %208 = arith.mulf %197, %207 : vector<24x128xf32>
    %209 = arith.truncf %208 : vector<24x128xf32> to vector<24x128xbf16>
    %210 = arith.index_cast %arg1 : i32 to index
    %c0_58 = arith.constant 0 : index
    %c0_59 = arith.constant 0 : index
    %211 = vector.load %arg14[%210, %c0_58, %c0_59] : memref<2x128x32xbf16, #tpu.memory_space<vmem>>, vector<1x128x32xbf16>
    %212 = vector.shape_cast %211 : vector<1x128x32xbf16> to vector<128x32xbf16>
    %cst_60 = arith.constant dense<0.000000e+00> : vector<24x32xf32>
    %213 = tpu.matmul %209, %212, %cst_60 {dimension_numbers = #tpu.dot_dimension_numbers<[1], [0], [0], [1], [0, 0, 1, 1], [], []>} : vector<24x128xbf16>, vector<128x32xbf16>, vector<24x32xf32> -> vector<24x32xf32>
    %214 = arith.index_cast %arg1 : i32 to index
    %c0_61 = arith.constant 0 : index
    %c0_62 = arith.constant 0 : index
    %215 = vector.load %arg15[%214, %c0_61, %c0_62] : memref<2x1x32xf32, #tpu.memory_space<vmem>>, vector<1x1x32xf32>
    %216 = vector.shape_cast %215 : vector<1x1x32xf32> to vector<1x32xf32>
    %217 = vector.broadcast %216 : vector<1x32xf32> to vector<24x32xf32>
    %218 = arith.addf %213, %217 : vector<24x32xf32>
    %219 = arith.addf %155, %218 : vector<24x32xf32>
    %220 = vector.shape_cast %219 : vector<24x32xf32> to vector<1x24x32xf32>
    %c0_63 = arith.constant 0 : index
    %c0_64 = arith.constant 0 : index
    %c0_65 = arith.constant 0 : index
    %221 = vector.load %arg16[%c0_63, %c0_64, %c0_65] : memref<1x24x32xf32, #tpu.memory_space<vmem>>, vector<1x24x32xf32>
    tpu.vector_store %arg16[%c0_63, %c0_64, %c0_65], %220 {strides = array<i32>} : memref<1x24x32xf32, #tpu.memory_space<vmem>>, vector<1x24x32xf32>,
    return
  }
  func.func @transform_0(%arg0: i32, %arg1: i32) -> (i32, i32, i32) {
    %c0_i32 = arith.constant 0 : i32
    %c0_i32_0 = arith.constant 0 : i32
    %c0_i32_1 = arith.constant 0 : i32
    return %arg0, %c0_i32, %c0_i32_0 : i32, i32, i32
  }
  func.func @transform_1(%arg0: i32, %arg1: i32) -> (i32, i32, i32) {
    %c0_i32 = arith.constant 0 : i32
    %c0_i32_0 = arith.constant 0 : i32
    %c0_i32_1 = arith.constant 0 : i32
    return %arg0, %c0_i32, %c0_i32_0 : i32, i32, i32
  }
  func.func @transform_2(%arg0: i32, %arg1: i32) -> (i32, i32, i32) {
    %c0_i32 = arith.constant 0 : i32
    %c0_i32_0 = arith.constant 0 : i32
    %c0_i32_1 = arith.constant 0 : i32
    %c0_i32_2 = arith.constant 0 : i32
    return %c0_i32, %c0_i32_0, %c0_i32_1 : i32, i32, i32
  }
  func.func @transform_3(%arg0: i32, %arg1: i32) -> (i32, i32, i32) {
    %c0_i32 = arith.constant 0 : i32
    %c0_i32_0 = arith.constant 0 : i32
    %c0_i32_1 = arith.constant 0 : i32
    %c0_i32_2 = arith.constant 0 : i32
    return %c0_i32, %c0_i32_0, %c0_i32_1 : i32, i32, i32
  }
  func.func @transform_4(%arg0: i32, %arg1: i32) -> (i32, i32, i32) {
    %c0_i32 = arith.constant 0 : i32
    %c0_i32_0 = arith.constant 0 : i32
    %c0_i32_1 = arith.constant 0 : i32
    %c0_i32_2 = arith.constant 0 : i32
    return %c0_i32, %c0_i32_0, %c0_i32_1 : i32, i32, i32
  }
  func.func @transform_5(%arg0: i32, %arg1: i32) -> (i32, i32, i32) {
    %c0_i32 = arith.constant 0 : i32
    %c0_i32_0 = arith.constant 0 : i32
    %c0_i32_1 = arith.constant 0 : i32
    %c0_i32_2 = arith.constant 0 : i32
    return %c0_i32, %c0_i32_0, %c0_i32_1 : i32, i32, i32
  }
  func.func @transform_6(%arg0: i32, %arg1: i32) -> (i32, i32, i32) {
    %c0_i32 = arith.constant 0 : i32
    %c0_i32_0 = arith.constant 0 : i32
    %c0_i32_1 = arith.constant 0 : i32
    %c0_i32_2 = arith.constant 0 : i32
    return %c0_i32, %c0_i32_0, %c0_i32_1 : i32, i32, i32
  }
  func.func @transform_7(%arg0: i32, %arg1: i32) -> (i32, i32, i32) {
    %c0_i32 = arith.constant 0 : i32
    %c0_i32_0 = arith.constant 0 : i32
    %c0_i32_1 = arith.constant 0 : i32
    %c0_i32_2 = arith.constant 0 : i32
    return %c0_i32, %c0_i32_0, %c0_i32_1 : i32, i32, i32
  }
  func.func @transform_8(%arg0: i32, %arg1: i32) -> (i32, i32, i32) {
    %c0_i32 = arith.constant 0 : i32
    %c0_i32_0 = arith.constant 0 : i32
    %c0_i32_1 = arith.constant 0 : i32
    %c0_i32_2 = arith.constant 0 : i32
    return %c0_i32, %c0_i32_0, %c0_i32_1 : i32, i32, i32
  }
  func.func @transform_9(%arg0: i32, %arg1: i32) -> (i32, i32, i32) {
    %c0_i32 = arith.constant 0 : i32
    %c0_i32_0 = arith.constant 0 : i32
    %c0_i32_1 = arith.constant 0 : i32
    %c0_i32_2 = arith.constant 0 : i32
    return %c0_i32, %c0_i32_0, %c0_i32_1 : i32, i32, i32
  }
  func.func @transform_10(%arg0: i32, %arg1: i32) -> (i32, i32, i32) {
    %c0_i32 = arith.constant 0 : i32
    %c0_i32_0 = arith.constant 0 : i32
    %c0_i32_1 = arith.constant 0 : i32
    %c0_i32_2 = arith.constant 0 : i32
    return %c0_i32, %c0_i32_0, %c0_i32_1 : i32, i32, i32
  }
  func.func @transform_11(%arg0: i32, %arg1: i32) -> (i32, i32, i32) {
    %c0_i32 = arith.constant 0 : i32
    %c0_i32_0 = arith.constant 0 : i32
    %c0_i32_1 = arith.constant 0 : i32
    %c0_i32_2 = arith.constant 0 : i32
    return %c0_i32, %c0_i32_0, %c0_i32_1 : i32, i32, i32
  }
  func.func @transform_12(%arg0: i32, %arg1: i32) -> (i32, i32, i32) {
    %c0_i32 = arith.constant 0 : i32
    %c0_i32_0 = arith.constant 0 : i32
    %c0_i32_1 = arith.constant 0 : i32
    %c0_i32_2 = arith.constant 0 : i32
    return %c0_i32, %c0_i32_0, %c0_i32_1 : i32, i32, i32
  }
  func.func @transform_13(%arg0: i32, %arg1: i32) -> (i32, i32, i32) {
    %c0_i32 = arith.constant 0 : i32
    %c0_i32_0 = arith.constant 0 : i32
    %c0_i32_1 = arith.constant 0 : i32
    %c0_i32_2 = arith.constant 0 : i32
    return %c0_i32, %c0_i32_0, %c0_i32_1 : i32, i32, i32
  }
  func.func @transform_14(%arg0: i32, %arg1: i32) -> (i32, i32, i32) {
    %c0_i32 = arith.constant 0 : i32
    %c0_i32_0 = arith.constant 0 : i32
    %c0_i32_1 = arith.constant 0 : i32
    return %arg0, %c0_i32, %c0_i32_0 : i32, i32, i32
  }
}

</mosaic_0001>

<llo_original>
// kernel: tpu_custom_call.1
$region0: #{tpu_custom_call.1}
  #allocation0 [shape = 'u32[]', space=smem, size = 0x4, offset = 0x4, fixed_abs, tag = 'smem constant byte address 0x4 - core index']
  #allocation1 [shape = 'u32[144,128]{1,0:T(1,128)}', space=vmem, size = 0x12000, scoped, tag = 'internal scratch']
  %s0 = inlined_call_operand.hbm [shape: f32[2,24,32], index: 0, kind: input, shape index: {}]
  %s1 = inlined_call_operand.hbm [shape: f32[2,1,24], index: 1, kind: input, shape index: {}]
  %s2 = inlined_call_operand.hbm [shape: f32[2,1,32], index: 2, kind: input, shape index: {}]
  %s3 = inlined_call_operand.hbm [shape: f32[2,1,32], index: 3, kind: input, shape index: {}]
  %s4 = inlined_call_operand.hbm [shape: bf16[2,32,96], index: 4, kind: input, shape index: {}]
  %s5 = inlined_call_operand.hbm [shape: f32[2,1,96], index: 5, kind: input, shape index: {}]
  %s6 = inlined_call_operand.hbm [shape: bf16[2,32,32], index: 6, kind: input, shape index: {}]
  %s7 = inlined_call_operand.hbm [shape: f32[2,1,32], index: 7, kind: input, shape index: {}]
  %s8 = inlined_call_operand.hbm [shape: f32[2,1,32], index: 8, kind: input, shape index: {}]
  %s9 = inlined_call_operand.hbm [shape: f32[2,1,32], index: 9, kind: input, shape index: {}]
  %s10 = inlined_call_operand.hbm [shape: bf16[2,32,128], index: 10, kind: input, shape index: {}]
  %s11 = inlined_call_operand.hbm [shape: f32[2,1,128], index: 11, kind: input, shape index: {}]
  %s12 = inlined_call_operand.hbm [shape: bf16[2,128,32], index: 12, kind: input, shape index: {}]
  %s13 = inlined_call_operand.hbm [shape: f32[2,1,32], index: 13, kind: input, shape index: {}]
  %s14 = inlined_call_operand.hbm [shape: f32[2,24,32], index: 14, kind: output, shape index: {}]
  %s15 = sld [smem:[#allocation0]]
  $region149: #{tpu_custom_call.1} parent=0
    _
  %s17 = ssub.s32 1, %s15
  %s18 = scalar_select 0, %s17, %s15
  $region1: #{tpu_custom_call.1} parent=0
    #allocation2 [shape = 'u8[24576]{0}', space=vmem, size = 0x6000, scoped, tag = 'input window, operand 0']
    #allocation3 [shape = 's32[2]{0}', space=sflag, size = 0x8, scoped, tag = 'scoped memory for tpu_custom_call.1']
    #allocation4 [shape = 's32[2]{0}', space=sflag, size = 0x8, scoped, tag = 'scoped memory for tpu_custom_call.1']
    #allocation5 [shape = 'u8[1024]{0}', space=vmem, size = 0x400, scoped, tag = 'input window, operand 1']
    #allocation6 [shape = 's32[2]{0}', space=sflag, size = 0x8, scoped, tag = 'scoped memory for tpu_custom_call.1']
    #allocation7 [shape = 'u8[1024]{0}', space=vmem, size = 0x400, scoped, tag = 'input window, operand 2, single buffered']
    #allocation8 [shape = 'u8[1024]{0}', space=vmem, size = 0x400, scoped, tag = 'input window, operand 3, single buffered']
    #allocation9 [shape = 's32[1]{0}', space=sflag, size = 0x4, scoped, tag = 'scoped memory for tpu_custom_call.1']
    #allocation10 [shape = 'u8[16384]{0}', space=vmem, size = 0x4000, scoped, tag = 'input window, operand 4, single buffered']
    #allocation11 [shape = 'u8[1024]{0}', space=vmem, size = 0x400, scoped, tag = 'input window, operand 5, single buffered']
    #allocation12 [shape = 's32[1]{0}', space=sflag, size = 0x4, scoped, tag = 'scoped memory for tpu_custom_call.1']
    #allocation13 [shape = 'u8[16384]{0}', space=vmem, size = 0x4000, scoped, tag = 'input window, operand 6, single buffered']
    #allocation14 [shape = 'u8[1024]{0}', space=vmem, size = 0x400, scoped, tag = 'input window, operand 7, single buffered']
    #allocation15 [shape = 's32[1]{0}', space=sflag, size = 0x4, scoped, tag = 'scoped memory for tpu_custom_call.1']
    #allocation16 [shape = 'u8[1024]{0}', space=vmem, size = 0x400, scoped, tag = 'input window, operand 8, single buffered']
    #allocation17 [shape = 'u8[1024]{0}', space=vmem, size = 0x400, scoped, tag = 'input window, operand 9, single buffered']
    #allocation18 [shape = 's32[1]{0}', space=sflag, size = 0x4, scoped, tag = 'scoped memory for tpu_custom_call.1']
    #allocation19 [shape = 'u8[16384]{0}', space=vmem, size = 0x4000, scoped, tag = 'input window, operand 10, single buffered']
    #allocation20 [shape = 'u8[1024]{0}', space=vmem, size = 0x400, scoped, tag = 'input window, operand 11, single buffered']
    #allocation21 [shape = 's32[1]{0}', space=sflag, size = 0x4, scoped, tag = 'scoped memory for tpu_custom_call.1']
    #allocation22 [shape = 'u8[65536]{0}', space=vmem, size = 0x10000, scoped, tag = 'input window, operand 12, single buffered']
    #allocation23 [shape = 'u8[1024]{0}', space=vmem, size = 0x400, scoped, tag = 'input window, operand 13, single buffered']
    #allocation24 [shape = 's32[1]{0}', space=sflag, size = 0x4, scoped, tag = 'scoped memory for tpu_custom_call.1']
    #allocation25 [shape = 'u8[24576]{0}', space=vmem, size = 0x6000, scoped, tag = 'output window, operand 0']
    %19 = vsyncpa [#allocation3], 0
    %s20 = scalar_lea.sflag [#allocation3], 1
    %21 = vsyncpa %s20, 0
    %22 = vsyncpa [#allocation6], 0
    %s23 = scalar_lea.sflag [#allocation6], 1
    %24 = vsyncpa %s23, 0
    %25 = vsyncpa [#allocation9], 0
    %26 = vsyncpa [#allocation12], 0
    %27 = vsyncpa [#allocation15], 0
    %28 = vsyncpa [#allocation18], 0
    %29 = vsyncpa [#allocation21], 0
    %30 = vsyncpa [#allocation24], 0
    %31 = vsyncpa [#allocation4], 0
    %s32 = scalar_lea.sflag [#allocation4], 1
    %33 = vsyncpa %s32, 0
    loop: start=0, step=1, limit=6
    $region2: #{tpu_custom_call.1} parent=1 // loop_pre_header
      _
    $region3: #{tpu_custom_call.1} parent=1 // loop_header
      %s35 = sphi 0, %s39
      %p36 = scmp.ge.s32.totalorder %s35, 6
      %s42 = sphi 0, %s54
      %s43 = sphi 0, %s50
      %s44 = sphi 0, %s42
      %s45 = sphi 0, %s43
      %s46 = sphi 0, %s44
      %s47 = sphi 0, %s45
      %s57 = sphi 0, %s59
      %s60 = sphi 0, %s57
      %s61 = sphi 0, %s60
      %s77 = sphi 0, %s61
      %s83 = sphi 0, %s85
      %s86 = sphi 0, %s83
      %s87 = sphi 0, %s86
      %s103 = sphi 0, %s87
      %s107 = sphi 0, %s107
      %s109 = sphi 0, %s107
      %s110 = sphi 0, %s109
      %s124 = sphi 0, %s110
      %s128 = sphi 0, %s128
      %s130 = sphi 0, %s128
      %s131 = sphi 0, %s130
      %s145 = sphi 0, %s131
      %s149 = sphi 0, %s149
      %s151 = sphi 0, %s149
      %s152 = sphi 0, %s151
      %s166 = sphi 0, %s152
      %s170 = sphi 0, %s170
      %s172 = sphi 0, %s170
      %s173 = sphi 0, %s172
      %s187 = sphi 0, %s173
      %s191 = sphi 0, %s191
      %s193 = sphi 0, %s191
      %s194 = sphi 0, %s193
      %s208 = sphi 0, %s194
      %s212 = sphi 0, %s212
      %s214 = sphi 0, %s212
      %s215 = sphi 0, %s214
      %s229 = sphi 0, %s215
      %s233 = sphi 0, %s233
      %s235 = sphi 0, %s233
      %s236 = sphi 0, %s235
      %s250 = sphi 0, %s236
      %s254 = sphi 0, %s254
      %s256 = sphi 0, %s254
      %s257 = sphi 0, %s256
      %s271 = sphi 0, %s257
      %s275 = sphi 0, %s275
      %s277 = sphi 0, %s275
      %s278 = sphi 0, %s277
      %s292 = sphi 0, %s278
      %s296 = sphi 0, %s296
      %s298 = sphi 0, %s296
      %s299 = sphi 0, %s298
      %s313 = sphi 0, %s299
      %s317 = sphi 0, %s317
      %s319 = sphi 0, %s317
      %s320 = sphi 0, %s319
      %s334 = sphi 0, %s320
      %s338 = sphi 0, %s338
      %s340 = sphi 0, %s338
      %s341 = sphi 0, %s340
      %s355 = sphi 0, %s341
      %s361 = sphi 0, %s363
      %s364 = sphi 0, %s361
      %s365 = sphi 0, %s364
      %s381 = sphi 0, %s365
    $region4: #{tpu_custom_call.1} parent=1 // loop_header_branch
      %38 = sbr.rel (%p36) target = $region8
    $region5: #{tpu_custom_call.1} parent=1 // loop_body
      %s40 = ssub.s32 %s35, 1
      %s41 = ssub.s32 %s35, 2
      %s48 = sadd.s32 1, %s43
      %p49 = scmp.ge.s32.totalorder %s48, 2
      %s50 = scalar_select %p49, 0, %s48
      %s51 = sadd.s32 1, %s42
      %s52 = scalar_select %p49, %s51, %s42
      %p53 = scmp.ge.s32.totalorder %s52, 2
      %s54 = scalar_select %p53, 0, %s52
      %s55 = ssub.s32 %s42, %s54
      %p56 = scmp.eq.s32.totalorder %s55, 0
      %s58 = sadd.s32 %s57, 1
      %s59 = scalar_select %p56, %s57, %s58
      %p62 = pneg %p56
      %p63 = scmp.eq.s32.totalorder %s35, 3
      %p64 = por %p62, %p63
      %p65 = scmp.ne.s32.totalorder %s57, %s60
      %p66 = scmp.eq.s32.totalorder %s35, 0
      %p67 = por %p65, %p66
      %p68 = scmp.ne.s32.totalorder %s57, %s60
      %p69 = scmp.eq.s32.totalorder %s40, 3
      %p70 = por %p68, %p69
      %p71 = scmp.ne.s32.totalorder %s60, %s61
      %p72 = scmp.eq.s32.totalorder %s40, 0
      %p73 = por %p71, %p72
      %p74 = scmp.ne.s32.totalorder %s60, %s61
      %p75 = scmp.eq.s32.totalorder %s41, 3
      %p76 = por %p74, %p75
      %p78 = scmp.ne.s32.totalorder %s61, %s77
      %p79 = scmp.eq.s32.totalorder %s41, 0
      %p80 = por %p78, %p79
      %s81 = ssub.s32 %s42, %s54
      %p82 = scmp.eq.s32.totalorder %s81, 0
      %s84 = sadd.s32 %s83, 1
      %s85 = scalar_select %p82, %s83, %s84
      %p88 = pneg %p82
      %p89 = scmp.eq.s32.totalorder %s35, 3
      %p90 = por %p88, %p89
      %p91 = scmp.ne.s32.totalorder %s83, %s86
      %p92 = scmp.eq.s32.totalorder %s35, 0
      %p93 = por %p91, %p92
      %p94 = scmp.ne.s32.totalorder %s83, %s86
      %p95 = scmp.eq.s32.totalorder %s40, 3
      %p96 = por %p94, %p95
      %p97 = scmp.ne.s32.totalorder %s86, %s87
      %p98 = scmp.eq.s32.totalorder %s40, 0
      %p99 = por %p97, %p98
      %p100 = scmp.ne.s32.totalorder %s86, %s87
      %p101 = scmp.eq.s32.totalorder %s41, 3
      %p102 = por %p100, %p101
      %p104 = scmp.ne.s32.totalorder %s87, %s103
      %p105 = scmp.eq.s32.totalorder %s41, 0
      %p106 = por %p104, %p105
      %s108 = sadd.s32 %s107, 1
      %p111 = scmp.eq.s32.totalorder %s35, 3
      %p112 = scmp.ne.s32.totalorder %s107, %s109
      %p113 = scmp.eq.s32.totalorder %s35, 0
      %p114 = por %p112, %p113
      %p115 = scmp.ne.s32.totalorder %s107, %s109
      %p116 = scmp.eq.s32.totalorder %s40, 3
      %p117 = por %p115, %p116
      %p118 = scmp.ne.s32.totalorder %s109, %s110
      %p119 = scmp.eq.s32.totalorder %s40, 0
      %p120 = por %p118, %p119
      %p121 = scmp.ne.s32.totalorder %s109, %s110
      %p122 = scmp.eq.s32.totalorder %s41, 3
      %p123 = por %p121, %p122
      %p125 = scmp.ne.s32.totalorder %s110, %s124
      %p126 = scmp.eq.s32.totalorder %s41, 0
      %p127 = por %p125, %p126
      %s129 = sadd.s32 %s128, 1
      %p132 = scmp.eq.s32.totalorder %s35, 3
      %p133 = scmp.ne.s32.totalorder %s128, %s130
      %p134 = scmp.eq.s32.totalorder %s35, 0
      %p135 = por %p133, %p134
      %p136 = scmp.ne.s32.totalorder %s128, %s130
      %p137 = scmp.eq.s32.totalorder %s40, 3
      %p138 = por %p136, %p137
      %p139 = scmp.ne.s32.totalorder %s130, %s131
      %p140 = scmp.eq.s32.totalorder %s40, 0
      %p141 = por %p139, %p140
      %p142 = scmp.ne.s32.totalorder %s130, %s131
      %p143 = scmp.eq.s32.totalorder %s41, 3
      %p144 = por %p142, %p143
      %p146 = scmp.ne.s32.totalorder %s131, %s145
      %p147 = scmp.eq.s32.totalorder %s41, 0
      %p148 = por %p146, %p147
      %s150 = sadd.s32 %s149, 1
      %p153 = scmp.eq.s32.totalorder %s35, 3
      %p154 = scmp.ne.s32.totalorder %s149, %s151
      %p155 = scmp.eq.s32.totalorder %s35, 0
      %p156 = por %p154, %p155
      %p157 = scmp.ne.s32.totalorder %s149, %s151
      %p158 = scmp.eq.s32.totalorder %s40, 3
      %p159 = por %p157, %p158
      %p160 = scmp.ne.s32.totalorder %s151, %s152
      %p161 = scmp.eq.s32.totalorder %s40, 0
      %p162 = por %p160, %p161
      %p163 = scmp.ne.s32.totalorder %s151, %s152
      %p164 = scmp.eq.s32.totalorder %s41, 3
      %p165 = por %p163, %p164
      %p167 = scmp.ne.s32.totalorder %s152, %s166
      %p168 = scmp.eq.s32.totalorder %s41, 0
      %p169 = por %p167, %p168
      %s171 = sadd.s32 %s170, 1
      %p174 = scmp.eq.s32.totalorder %s35, 3
      %p175 = scmp.ne.s32.totalorder %s170, %s172
      %p176 = scmp.eq.s32.totalorder %s35, 0
      %p177 = por %p175, %p176
      %p178 = scmp.ne.s32.totalorder %s170, %s172
      %p179 = scmp.eq.s32.totalorder %s40, 3
      %p180 = por %p178, %p179
      %p181 = scmp.ne.s32.totalorder %s172, %s173
      %p182 = scmp.eq.s32.totalorder %s40, 0
      %p183 = por %p181, %p182
      %p184 = scmp.ne.s32.totalorder %s172, %s173
      %p185 = scmp.eq.s32.totalorder %s41, 3
      %p186 = por %p184, %p185
      %p188 = scmp.ne.s32.totalorder %s173, %s187
      %p189 = scmp.eq.s32.totalorder %s41, 0
      %p190 = por %p188, %p189
      %s192 = sadd.s32 %s191, 1
      %p195 = scmp.eq.s32.totalorder %s35, 3
      %p196 = scmp.ne.s32.totalorder %s191, %s193
      %p197 = scmp.eq.s32.totalorder %s35, 0
      %p198 = por %p196, %p197
      %p199 = scmp.ne.s32.totalorder %s191, %s193
      %p200 = scmp.eq.s32.totalorder %s40, 3
      %p201 = por %p199, %p200
      %p202 = scmp.ne.s32.totalorder %s193, %s194
      %p203 = scmp.eq.s32.totalorder %s40, 0
      %p204 = por %p202, %p203
      %p205 = scmp.ne.s32.totalorder %s193, %s194
      %p206 = scmp.eq.s32.totalorder %s41, 3
      %p207 = por %p205, %p206
      %p209 = scmp.ne.s32.totalorder %s194, %s208
      %p210 = scmp.eq.s32.totalorder %s41, 0
      %p211 = por %p209, %p210
      %s213 = sadd.s32 %s212, 1
      %p216 = scmp.eq.s32.totalorder %s35, 3
      %p217 = scmp.ne.s32.totalorder %s212, %s214
      %p218 = scmp.eq.s32.totalorder %s35, 0
      %p219 = por %p217, %p218
      %p220 = scmp.ne.s32.totalorder %s212, %s214
      %p221 = scmp.eq.s32.totalorder %s40, 3
      %p222 = por %p220, %p221
      %p223 = scmp.ne.s32.totalorder %s214, %s215
      %p224 = scmp.eq.s32.totalorder %s40, 0
      %p225 = por %p223, %p224
      %p226 = scmp.ne.s32.totalorder %s214, %s215
      %p227 = scmp.eq.s32.totalorder %s41, 3
      %p228 = por %p226, %p227
      %p230 = scmp.ne.s32.totalorder %s215, %s229
      %p231 = scmp.eq.s32.totalorder %s41, 0
      %p232 = por %p230, %p231
      %s234 = sadd.s32 %s233, 1
      %p237 = scmp.eq.s32.totalorder %s35, 3
      %p238 = scmp.ne.s32.totalorder %s233, %s235
      %p239 = scmp.eq.s32.totalorder %s35, 0
      %p240 = por %p238, %p239
      %p241 = scmp.ne.s32.totalorder %s233, %s235
      %p242 = scmp.eq.s32.totalorder %s40, 3
      %p243 = por %p241, %p242
      %p244 = scmp.ne.s32.totalorder %s235, %s236
      %p245 = scmp.eq.s32.totalorder %s40, 0
      %p246 = por %p244, %p245
      %p247 = scmp.ne.s32.totalorder %s235, %s236
      %p248 = scmp.eq.s32.totalorder %s41, 3
      %p249 = por %p247, %p248
      %p251 = scmp.ne.s32.totalorder %s236, %s250
      %p252 = scmp.eq.s32.totalorder %s41, 0
      %p253 = por %p251, %p252
      %s255 = sadd.s32 %s254, 1
      %p258 = scmp.eq.s32.totalorder %s35, 3
      %p259 = scmp.ne.s32.totalorder %s254, %s256
      %p260 = scmp.eq.s32.totalorder %s35, 0
      %p261 = por %p259, %p260
      %p262 = scmp.ne.s32.totalorder %s254, %s256
      %p263 = scmp.eq.s32.totalorder %s40, 3
      %p264 = por %p262, %p263
      %p265 = scmp.ne.s32.totalorder %s256, %s257
      %p266 = scmp.eq.s32.totalorder %s40, 0
      %p267 = por %p265, %p266
      %p268 = scmp.ne.s32.totalorder %s256, %s257
      %p269 = scmp.eq.s32.totalorder %s41, 3
      %p270 = por %p268, %p269
      %p272 = scmp.ne.s32.totalorder %s257, %s271
      %p273 = scmp.eq.s32.totalorder %s41, 0
      %p274 = por %p272, %p273
      %s276 = sadd.s32 %s275, 1
      %p279 = scmp.eq.s32.totalorder %s35, 3
      %p280 = scmp.ne.s32.totalorder %s275, %s277
      %p281 = scmp.eq.s32.totalorder %s35, 0
      %p282 = por %p280, %p281
      %p283 = scmp.ne.s32.totalorder %s275, %s277
      %p284 = scmp.eq.s32.totalorder %s40, 3
      %p285 = por %p283, %p284
      %p286 = scmp.ne.s32.totalorder %s277, %s278
      %p287 = scmp.eq.s32.totalorder %s40, 0
      %p288 = por %p286, %p287
      %p289 = scmp.ne.s32.totalorder %s277, %s278
      %p290 = scmp.eq.s32.totalorder %s41, 3
      %p291 = por %p289, %p290
      %p293 = scmp.ne.s32.totalorder %s278, %s292
      %p294 = scmp.eq.s32.totalorder %s41, 0
      %p295 = por %p293, %p294
      %s297 = sadd.s32 %s296, 1
      %p300 = scmp.eq.s32.totalorder %s35, 3
      %p301 = scmp.ne.s32.totalorder %s296, %s298
      %p302 = scmp.eq.s32.totalorder %s35, 0
      %p303 = por %p301, %p302
      %p304 = scmp.ne.s32.totalorder %s296, %s298
      %p305 = scmp.eq.s32.totalorder %s40, 3
      %p306 = por %p304, %p305
      %p307 = scmp.ne.s32.totalorder %s298, %s299
      %p308 = scmp.eq.s32.totalorder %s40, 0
      %p309 = por %p307, %p308
      %p310 = scmp.ne.s32.totalorder %s298, %s299
      %p311 = scmp.eq.s32.totalorder %s41, 3
      %p312 = por %p310, %p311
      %p314 = scmp.ne.s32.totalorder %s299, %s313
      %p315 = scmp.eq.s32.totalorder %s41, 0
      %p316 = por %p314, %p315
      %s318 = sadd.s32 %s317, 1
      %p321 = scmp.eq.s32.totalorder %s35, 3
      %p322 = scmp.ne.s32.totalorder %s317, %s319
      %p323 = scmp.eq.s32.totalorder %s35, 0
      %p324 = por %p322, %p323
      %p325 = scmp.ne.s32.totalorder %s317, %s319
      %p326 = scmp.eq.s32.totalorder %s40, 3
      %p327 = por %p325, %p326
      %p328 = scmp.ne.s32.totalorder %s319, %s320
      %p329 = scmp.eq.s32.totalorder %s40, 0
      %p330 = por %p328, %p329
      %p331 = scmp.ne.s32.totalorder %s319, %s320
      %p332 = scmp.eq.s32.totalorder %s41, 3
      %p333 = por %p331, %p332
      %p335 = scmp.ne.s32.totalorder %s320, %s334
      %p336 = scmp.eq.s32.totalorder %s41, 0
      %p337 = por %p335, %p336
      %s339 = sadd.s32 %s338, 1
      %p342 = scmp.eq.s32.totalorder %s35, 3
      %p343 = scmp.ne.s32.totalorder %s338, %s340
      %p344 = scmp.eq.s32.totalorder %s35, 0
      %p345 = por %p343, %p344
      %p346 = scmp.ne.s32.totalorder %s338, %s340
      %p347 = scmp.eq.s32.totalorder %s40, 3
      %p348 = por %p346, %p347
      %p349 = scmp.ne.s32.totalorder %s340, %s341
      %p350 = scmp.eq.s32.totalorder %s40, 0
      %p351 = por %p349, %p350
      %p352 = scmp.ne.s32.totalorder %s340, %s341
      %p353 = scmp.eq.s32.totalorder %s41, 3
      %p354 = por %p352, %p353
      %p356 = scmp.ne.s32.totalorder %s341, %s355
      %p357 = scmp.eq.s32.totalorder %s41, 0
      %p358 = por %p356, %p357
      %s359 = ssub.s32 %s42, %s54
      %p360 = scmp.eq.s32.totalorder %s359, 0
      %s362 = sadd.s32 %s361, 1
      %s363 = scalar_select %p360, %s361, %s362
      %p366 = pneg %p360
      %p367 = scmp.eq.s32.totalorder %s35, 3
      %p368 = por %p366, %p367
      %p369 = scmp.ne.s32.totalorder %s361, %s364
      %p370 = scmp.eq.s32.totalorder %s35, 0
      %p371 = por %p369, %p370
      %p372 = scmp.ne.s32.totalorder %s361, %s364
      %p373 = scmp.eq.s32.totalorder %s40, 3
      %p374 = por %p372, %p373
      %p375 = scmp.ne.s32.totalorder %s364, %s365
      %p376 = scmp.eq.s32.totalorder %s40, 0
      %p377 = por %p375, %p376
      %p378 = scmp.ne.s32.totalorder %s364, %s365
      %p379 = scmp.eq.s32.totalorder %s41, 3
      %p380 = por %p378, %p379
      %p382 = scmp.ne.s32.totalorder %s365, %s381
      %p383 = scmp.eq.s32.totalorder %s41, 0
      %p384 = por %p382, %p383
      %p385 = scmp.le.s32.totalorder 1, %s35
      %p386 = scmp.lt.s32.totalorder %s35, 5
      %p387 = pnand %p385, %p386
      %p388 = pneg %p387
      // Predicated region
      $region9: #{tpu_custom_call.1} parent=5 // pred_check
        _
      $region10: #{tpu_custom_call.1} parent=5 // pred_check_branch
        %390 = sbr.rel (%p387) target = $region12
      $region11: #{tpu_custom_call.1} parent=5 // pred_region
        %s391 = ssub.s32 %s35, 1
        // Predicated region
        $region13: #{tpu_custom_call.1} parent=11 // pred_check
          %p392 = pneg %p120
        $region14: #{tpu_custom_call.1} parent=11 // pred_check_branch
          %394 = sbr.rel (%p392) target = $region16
        $region15: #{tpu_custom_call.1} parent=11 // pred_region
          %s396 = ssub.s32 32, 32
          %397 = vsyncadd [#allocation6], %s396
          %s398 = sshll.u32 [#allocation7], 4
          %s399 = int_to_ptr.vmem [resolvable:$true] %s398
          %404 = dma.hbm_to_vmem [thread:$0]  %s2, 32, %s399, [#allocation6], 16, 16, 1
        $region16: #{tpu_custom_call.1} parent=11 // pred_fallthru
          _
        // Predicated region
        $region17: #{tpu_custom_call.1} parent=11 // pred_check
          %p405 = pneg %p141
        $region18: #{tpu_custom_call.1} parent=11 // pred_check_branch
          %407 = sbr.rel (%p405) target = $region20
        $region19: #{tpu_custom_call.1} parent=11 // pred_region
          %s409 = ssub.s32 32, 32
          %410 = vsyncadd [#allocation9], %s409
          %s411 = sshll.u32 [#allocation8], 4
          %s412 = int_to_ptr.vmem [resolvable:$true] %s411
          %417 = dma.hbm_to_vmem [thread:$0]  %s3, 32, %s412, [#allocation9], 16, 16, 1
        $region20: #{tpu_custom_call.1} parent=11 // pred_fallthru
          _
        // Predicated region
        $region21: #{tpu_custom_call.1} parent=11 // pred_check
          %p418 = pneg %p162
        $region22: #{tpu_custom_call.1} parent=11 // pred_check_branch
          %420 = sbr.rel (%p418) target = $region24
        $region23: #{tpu_custom_call.1} parent=11 // pred_region
          %s422 = ssub.s32 512, 512
          %423 = vsyncadd [#allocation9], %s422
          %s424 = sshll.u32 [#allocation10], 4
          %s425 = int_to_ptr.vmem [resolvable:$true] %s424
          %430 = dma.hbm_to_vmem [thread:$0]  %s4, 512, %s425, [#allocation9], 64, 64, 4
        $region24: #{tpu_custom_call.1} parent=11 // pred_fallthru
          _
        // Predicated region
        $region25: #{tpu_custom_call.1} parent=11 // pred_check
          %p431 = pneg %p183
        $region26: #{tpu_custom_call.1} parent=11 // pred_check_branch
          %433 = sbr.rel (%p431) target = $region28
        $region27: #{tpu_custom_call.1} parent=11 // pred_region
          %s435 = ssub.s32 32, 32
          %436 = vsyncadd [#allocation12], %s435
          %s437 = sshll.u32 [#allocation11], 4
          %s438 = int_to_ptr.vmem [resolvable:$true] %s437
          %443 = dma.hbm_to_vmem [thread:$0]  %s5, 32, %s438, [#allocation12], 16, 16, 1
        $region28: #{tpu_custom_call.1} parent=11 // pred_fallthru
          _
        // Predicated region
        $region29: #{tpu_custom_call.1} parent=11 // pred_check
          %p444 = pneg %p204
        $region30: #{tpu_custom_call.1} parent=11 // pred_check_branch
          %446 = sbr.rel (%p444) target = $region32
        $region31: #{tpu_custom_call.1} parent=11 // pred_region
          %s448 = ssub.s32 512, 512
          %449 = vsyncadd [#allocation12], %s448
          %s450 = sshll.u32 [#allocation13], 4
          %s451 = int_to_ptr.vmem [resolvable:$true] %s450
          %456 = dma.hbm_to_vmem [thread:$0]  %s6, 512, %s451, [#allocation12], 64, 64, 4
        $region32: #{tpu_custom_call.1} parent=11 // pred_fallthru
          _
        // Predicated region
        $region33: #{tpu_custom_call.1} parent=11 // pred_check
          %p457 = pneg %p225
        $region34: #{tpu_custom_call.1} parent=11 // pred_check_branch
          %459 = sbr.rel (%p457) target = $region36
        $region35: #{tpu_custom_call.1} parent=11 // pred_region
          %s461 = ssub.s32 32, 32
          %462 = vsyncadd [#allocation15], %s461
          %s463 = sshll.u32 [#allocation14], 4
          %s464 = int_to_ptr.vmem [resolvable:$true] %s463
          %469 = dma.hbm_to_vmem [thread:$0]  %s7, 32, %s464, [#allocation15], 16, 16, 1
        $region36: #{tpu_custom_call.1} parent=11 // pred_fallthru
          _
        // Predicated region
        $region37: #{tpu_custom_call.1} parent=11 // pred_check
          %p470 = pneg %p246
        $region38: #{tpu_custom_call.1} parent=11 // pred_check_branch
          %472 = sbr.rel (%p470) target = $region40
        $region39: #{tpu_custom_call.1} parent=11 // pred_region
          %s474 = ssub.s32 32, 32
          %475 = vsyncadd [#allocation15], %s474
          %s476 = sshll.u32 [#allocation16], 4
          %s477 = int_to_ptr.vmem [resolvable:$true] %s476
          %482 = dma.hbm_to_vmem [thread:$0]  %s8, 32, %s477, [#allocation15], 16, 16, 1
        $region40: #{tpu_custom_call.1} parent=11 // pred_fallthru
          _
        // Predicated region
        $region41: #{tpu_custom_call.1} parent=11 // pred_check
          %p483 = pneg %p267
        $region42: #{tpu_custom_call.1} parent=11 // pred_check_branch
          %485 = sbr.rel (%p483) target = $region44
        $region43: #{tpu_custom_call.1} parent=11 // pred_region
          %s487 = ssub.s32 32, 32
          %488 = vsyncadd [#allocation18], %s487
          %s489 = sshll.u32 [#allocation17], 4
          %s490 = int_to_ptr.vmem [resolvable:$true] %s489
          %495 = dma.hbm_to_vmem [thread:$0]  %s9, 32, %s490, [#allocation18], 16, 16, 1
        $region44: #{tpu_custom_call.1} parent=11 // pred_fallthru
          _
        // Predicated region
        $region45: #{tpu_custom_call.1} parent=11 // pred_check
          %p496 = pneg %p288
        $region46: #{tpu_custom_call.1} parent=11 // pred_check_branch
          %498 = sbr.rel (%p496) target = $region48
        $region47: #{tpu_custom_call.1} parent=11 // pred_region
          %s500 = ssub.s32 512, 512
          %501 = vsyncadd [#allocation18], %s500
          %s502 = sshll.u32 [#allocation19], 4
          %s503 = int_to_ptr.vmem [resolvable:$true] %s502
          %508 = dma.hbm_to_vmem [thread:$0]  %s10, 512, %s503, [#allocation18], 64, 64, 4
        $region48: #{tpu_custom_call.1} parent=11 // pred_fallthru
          _
        // Predicated region
        $region49: #{tpu_custom_call.1} parent=11 // pred_check
          %p509 = pneg %p309
        $region50: #{tpu_custom_call.1} parent=11 // pred_check_branch
          %511 = sbr.rel (%p509) target = $region52
        $region51: #{tpu_custom_call.1} parent=11 // pred_region
          %s513 = ssub.s32 32, 32
          %514 = vsyncadd [#allocation21], %s513
          %s515 = sshll.u32 [#allocation20], 4
          %s516 = int_to_ptr.vmem [resolvable:$true] %s515
          %521 = dma.hbm_to_vmem [thread:$0]  %s11, 32, %s516, [#allocation21], 16, 16, 1
        $region52: #{tpu_custom_call.1} parent=11 // pred_fallthru
          _
        // Predicated region
        $region53: #{tpu_custom_call.1} parent=11 // pred_check
          %p522 = pneg %p330
        $region54: #{tpu_custom_call.1} parent=11 // pred_check_branch
          %524 = sbr.rel (%p522) target = $region56
        $region55: #{tpu_custom_call.1} parent=11 // pred_region
          %s526 = ssub.s32 2048, 2048
          %527 = vsyncadd [#allocation21], %s526
          %s528 = sshll.u32 [#allocation22], 4
          %s529 = int_to_ptr.vmem [resolvable:$true] %s528
          %534 = dma.hbm_to_vmem [thread:$0]  %s12, 2048, %s529, [#allocation21], 64, 64, 4
        $region56: #{tpu_custom_call.1} parent=11 // pred_fallthru
          _
        // Predicated region
        $region57: #{tpu_custom_call.1} parent=11 // pred_check
          %p535 = pneg %p351
        $region58: #{tpu_custom_call.1} parent=11 // pred_check_branch
          %537 = sbr.rel (%p535) target = $region60
        $region59: #{tpu_custom_call.1} parent=11 // pred_region
          %s539 = ssub.s32 32, 32
          %540 = vsyncadd [#allocation24], %s539
          %s541 = sshll.u32 [#allocation23], 4
          %s542 = int_to_ptr.vmem [resolvable:$true] %s541
          %547 = dma.hbm_to_vmem [thread:$0]  %s13, 32, %s542, [#allocation24], 16, 16, 1
        $region60: #{tpu_custom_call.1} parent=11 // pred_fallthru
          _
      $region12: #{tpu_custom_call.1} parent=5 // pred_fallthru
        _
      %p548 = scmp.lt.s32.totalorder %s35, 4
      // Predicated region
      $region61: #{tpu_custom_call.1} parent=5 // pred_check
        %p549 = pneg %p548
      $region62: #{tpu_custom_call.1} parent=5 // pred_check_branch
        %551 = sbr.rel (%p549) target = $region64
      $region63: #{tpu_custom_call.1} parent=5 // pred_region
        // Predicated region
        $region65: #{tpu_custom_call.1} parent=63 // pred_check
          %p552 = pneg %p67
        $region66: #{tpu_custom_call.1} parent=63 // pred_check_branch
          %554 = sbr.rel (%p552) target = $region68
        $region67: #{tpu_custom_call.1} parent=63 // pred_region
          %s555 = sand.u32 %s57, 1
          %s556 = scalar_lea.sflag [#allocation3], %s555
          %s557 = sand.u32 %s57, 1
          %s558 = smul.addr %s557, 24
          %s559 = scalar_lea.vmem [#allocation2], %s558
          %s561 = ssub.s32 384, 384
          %562 = vsyncadd %s556, %s561
          %s563 = smul.addr %s42, 3
          %s564 = smul.addr %s563, 128
          %s565 = scalar_lea.hbm %s0, %s564
          %s566 = sshll.u32 %s559, 4
          %s567 = int_to_ptr.vmem [resolvable:$true] %s566
          %572 = dma.hbm_to_vmem [thread:$0]  %s565, 384, %s567, %s556, 128, 128, 8
        $region68: #{tpu_custom_call.1} parent=63 // pred_fallthru
          _
        // Predicated region
        $region69: #{tpu_custom_call.1} parent=63 // pred_check
          %p573 = pneg %p93
        $region70: #{tpu_custom_call.1} parent=63 // pred_check_branch
          %575 = sbr.rel (%p573) target = $region72
        $region71: #{tpu_custom_call.1} parent=63 // pred_region
          %s576 = sand.u32 %s35, 1
          %s577 = scalar_lea.sflag [#allocation6], %s576
          %s578 = sand.u32 %s83, 1
          %s579 = scalar_lea.vmem [#allocation5], %s578
          %s581 = ssub.s32 16, 16
          %582 = vsyncadd %s577, %s581
          %s583 = smul.addr %s42, 16
          %s584 = scalar_lea.hbm %s1, %s583
          %s586 = sshll.u32 %s579, 4
          %s587 = int_to_ptr.vmem [resolvable:$true] %s586
          %589 = dma.hbm_to_vmem [thread:$0]  %s584, 16, %s587, %s577
        $region72: #{tpu_custom_call.1} parent=63 // pred_fallthru
          _
      $region64: #{tpu_custom_call.1} parent=5 // pred_fallthru
        _
      %p590 = scmp.le.s32.totalorder 1, %s35
      %p591 = scmp.lt.s32.totalorder %s35, 5
      %p592 = pnand %p590, %p591
      %p593 = pneg %p592
      // Predicated region
      $region73: #{tpu_custom_call.1} parent=5 // pred_check
        _
      $region74: #{tpu_custom_call.1} parent=5 // pred_check_branch
        %595 = sbr.rel (%p592) target = $region76
      $region75: #{tpu_custom_call.1} parent=5 // pred_region
        %s596 = ssub.s32 %s35, 1
        %s597 = sand.u32 %s60, 1
        %s598 = scalar_lea.sflag [#allocation3], %s597
        %s599 = sand.u32 %s60, 1
        %s600 = smul.addr %s599, 24
        %s601 = scalar_lea.vmem [#allocation2], %s600
        // Predicated region
        $region77: #{tpu_custom_call.1} parent=75 // pred_check
          %p602 = pneg %p73
        $region78: #{tpu_custom_call.1} parent=75 // pred_check_branch
          %604 = sbr.rel (%p602) target = $region80
        $region79: #{tpu_custom_call.1} parent=75 // pred_region
          %605 = dma.done %s598, 384
        $region80: #{tpu_custom_call.1} parent=75 // pred_fallthru
          _
        %s606 = sand.u32 %s40, 1
        %s607 = scalar_lea.sflag [#allocation6], %s606
        %s608 = sand.u32 %s86, 1
        %s609 = scalar_lea.vmem [#allocation5], %s608
        // Predicated region
        $region81: #{tpu_custom_call.1} parent=75 // pred_check
          %p610 = pneg %p99
        $region82: #{tpu_custom_call.1} parent=75 // pred_check_branch
          %612 = sbr.rel (%p610) target = $region84
        $region83: #{tpu_custom_call.1} parent=75 // pred_region
          %613 = dma.done %s607, 16
        $region84: #{tpu_custom_call.1} parent=75 // pred_fallthru
          _
        // Predicated region
        $region85: #{tpu_custom_call.1} parent=75 // pred_check
          %p614 = pneg %p120
        $region86: #{tpu_custom_call.1} parent=75 // pred_check_branch
          %616 = sbr.rel (%p614) target = $region88
        $region87: #{tpu_custom_call.1} parent=75 // pred_region
          %617 = dma.done [#allocation6], 32
        $region88: #{tpu_custom_call.1} parent=75 // pred_fallthru
          _
        // Predicated region
        $region89: #{tpu_custom_call.1} parent=75 // pred_check
          %p618 = pneg %p141
        $region90: #{tpu_custom_call.1} parent=75 // pred_check_branch
          %620 = sbr.rel (%p618) target = $region92
        $region91: #{tpu_custom_call.1} parent=75 // pred_region
          %621 = dma.done [#allocation9], 32
        $region92: #{tpu_custom_call.1} parent=75 // pred_fallthru
          _
        // Predicated region
        $region93: #{tpu_custom_call.1} parent=75 // pred_check
          %p622 = pneg %p162
        $region94: #{tpu_custom_call.1} parent=75 // pred_check_branch
          %624 = sbr.rel (%p622) target = $region96
        $region95: #{tpu_custom_call.1} parent=75 // pred_region
          %625 = dma.done [#allocation9], 512
        $region96: #{tpu_custom_call.1} parent=75 // pred_fallthru
          _
        // Predicated region
        $region97: #{tpu_custom_call.1} parent=75 // pred_check
          %p626 = pneg %p183
        $region98: #{tpu_custom_call.1} parent=75 // pred_check_branch
          %628 = sbr.rel (%p626) target = $region100
        $region99: #{tpu_custom_call.1} parent=75 // pred_region
          %629 = dma.done [#allocation12], 32
        $region100: #{tpu_custom_call.1} parent=75 // pred_fallthru
          _
        // Predicated region
        $region101: #{tpu_custom_call.1} parent=75 // pred_check
          %p630 = pneg %p204
        $region102: #{tpu_custom_call.1} parent=75 // pred_check_branch
          %632 = sbr.rel (%p630) target = $region104
        $region103: #{tpu_custom_call.1} parent=75 // pred_region
          %633 = dma.done [#allocation12], 512
        $region104: #{tpu_custom_call.1} parent=75 // pred_fallthru
          _
        // Predicated region
        $region105: #{tpu_custom_call.1} parent=75 // pred_check
          %p634 = pneg %p225
        $region106: #{tpu_custom_call.1} parent=75 // pred_check_branch
          %636 = sbr.rel (%p634) target = $region108
        $region107: #{tpu_custom_call.1} parent=75 // pred_region
          %637 = dma.done [#allocation15], 32
        $region108: #{tpu_custom_call.1} parent=75 // pred_fallthru
          _
        // Predicated region
        $region109: #{tpu_custom_call.1} parent=75 // pred_check
          %p638 = pneg %p246
        $region110: #{tpu_custom_call.1} parent=75 // pred_check_branch
          %640 = sbr.rel (%p638) target = $region112
        $region111: #{tpu_custom_call.1} parent=75 // pred_region
          %641 = dma.done [#allocation15], 32
        $region112: #{tpu_custom_call.1} parent=75 // pred_fallthru
          _
        // Predicated region
        $region113: #{tpu_custom_call.1} parent=75 // pred_check
          %p642 = pneg %p267
        $region114: #{tpu_custom_call.1} parent=75 // pred_check_branch
          %644 = sbr.rel (%p642) target = $region116
        $region115: #{tpu_custom_call.1} parent=75 // pred_region
          %645 = dma.done [#allocation18], 32
        $region116: #{tpu_custom_call.1} parent=75 // pred_fallthru
          _
        // Predicated region
        $region117: #{tpu_custom_call.1} parent=75 // pred_check
          %p646 = pneg %p288
        $region118: #{tpu_custom_call.1} parent=75 // pred_check_branch
          %648 = sbr.rel (%p646) target = $region120
        $region119: #{tpu_custom_call.1} parent=75 // pred_region
          %649 = dma.done [#allocation18], 512
        $region120: #{tpu_custom_call.1} parent=75 // pred_fallthru
          _
        // Predicated region
        $region121: #{tpu_custom_call.1} parent=75 // pred_check
          %p650 = pneg %p309
        $region122: #{tpu_custom_call.1} parent=75 // pred_check_branch
          %652 = sbr.rel (%p650) target = $region124
        $region123: #{tpu_custom_call.1} parent=75 // pred_region
          %653 = dma.done [#allocation21], 32
        $region124: #{tpu_custom_call.1} parent=75 // pred_fallthru
          _
        // Predicated region
        $region125: #{tpu_custom_call.1} parent=75 // pred_check
          %p654 = pneg %p330
        $region126: #{tpu_custom_call.1} parent=75 // pred_check_branch
          %656 = sbr.rel (%p654) target = $region128
        $region127: #{tpu_custom_call.1} parent=75 // pred_region
          %657 = dma.done [#allocation21], 2048
        $region128: #{tpu_custom_call.1} parent=75 // pred_fallthru
          _
        // Predicated region
        $region129: #{tpu_custom_call.1} parent=75 // pred_check
          %p658 = pneg %p351
        $region130: #{tpu_custom_call.1} parent=75 // pred_check_branch
          %660 = sbr.rel (%p658) target = $region132
        $region131: #{tpu_custom_call.1} parent=75 // pred_region
          %661 = dma.done [#allocation24], 32
        $region132: #{tpu_custom_call.1} parent=75 // pred_fallthru
          _
        %s662 = sand.u32 %s60, 1
        %s663 = scalar_lea.sflag [#allocation3], %s662
        %s664 = sand.u32 %s60, 1
        %s665 = smul.addr %s664, 24
        %s666 = scalar_lea.vmem [#allocation2], %s665
        %p667 = pneg %p73
        %p668 = pneg %p70
        %s669 = sand.u32 %s40, 1
        %s670 = scalar_lea.sflag [#allocation6], %s669
        %s671 = sand.u32 %s86, 1
        %s672 = scalar_lea.vmem [#allocation5], %s671
        %p673 = pneg %p99
        %p674 = pneg %p96
        %p675 = pneg %p120
        %p676 = pneg %p117
        %p677 = pneg %p141
        %p678 = pneg %p138
        %p679 = pneg %p162
        %p680 = pneg %p159
        %p681 = pneg %p183
        %p682 = pneg %p180
        %p683 = pneg %p204
        %p684 = pneg %p201
        %p685 = pneg %p225
        %p686 = pneg %p222
        %p687 = pneg %p246
        %p688 = pneg %p243
        %p689 = pneg %p267
        %p690 = pneg %p264
        %p691 = pneg %p288
        %p692 = pneg %p285
        %p693 = pneg %p309
        %p694 = pneg %p306
        %p695 = pneg %p330
        %p696 = pneg %p327
        %p697 = pneg %p351
        %p698 = pneg %p348
        %p699 = pneg %p377
        %p700 = pneg %p374
        %s701 = sand.u32 %s364, 1
        %s702 = scalar_lea.sflag [#allocation4], %s701
        %s703 = sand.u32 %s364, 1
        %s704 = smul.addr %s703, 24
        %s705 = scalar_lea.vmem [#allocation25], %s704
        %p707 = scmp.eq.s32.totalorder %s45, 0
        // Predicated region
        $region133: #{tpu_custom_call.1} parent=75 // pred_check
          %p708 = pneg %p707
        $region134: #{tpu_custom_call.1} parent=75 // pred_check_branch
          %710 = sbr.rel (%p708) target = $region136
        $region135: #{tpu_custom_call.1} parent=75 // pred_region
          %v711 = vld [vmem:[%s601] sm:$0xff]
          %v712 = vld [vmem:[%s601 + $0x8] sm:$0xff]
          %v713 = vld [vmem:[%s601 + $0x10] sm:$0xff]
          %vm714 = vcmask 261120
          %715 = vst.msk [vmem:[%s705] sm:$0xff] %vm714, %v711
          %716 = vst.msk [vmem:[%s705 + $0x8] sm:$0xff] %vm714, %v712
          %717 = vst.msk [vmem:[%s705 + $0x10] sm:$0xff] %vm714, %v713
        $region136: #{tpu_custom_call.1} parent=75 // pred_fallthru
          _
        %v718 = vld [vmem:[%s705] sm:$0xff]
        %v719 = vld [vmem:[%s705 + $0x8] sm:$0xff]
        %v720 = vld [vmem:[%s705 + $0x10] sm:$0xff]
        %v721 = vld [vmem:[%s609] sm:$0x1]
        %v723 = vlaneseq
        %v724 = vshrl.u32 %v723, 7
        %v725 = vsub.s32 0, %v724
        %v726 = vrot.slane %v721, %v725
        %s728 = scalar_lea.vmem [#allocation7], %s45
        %v729 = vld [vmem:[%s728] sm:$0x1]
        %s730 = scalar_lea.vmem [#allocation8], %s45
        %v731 = vld [vmem:[%s730] sm:$0x1]
        %vm732 = vcmask 261120
        %v733 = vsel %vm732, %v718, 0.0
        %734 = vadd.xlane.f32.xlu0 %v733
        %v735 = vpop.xlane.xlu0 %734
        %v736 = vsel %vm732, %v719, 0.0
        %737 = vadd.xlane.f32.xlu0 %v736
        %v738 = vpop.xlane.xlu0 %737
        %v739 = vsel %vm732, %v720, 0.0
        %740 = vadd.xlane.f32.xlu0 %v739
        %v741 = vpop.xlane.xlu0 %740
        %v742 = vrcp.pop 32.0
        %v743 = vmul.f32 %v735, %v742
        %v744 = vmul.f32 %v738, %v742
        %v745 = vmul.f32 %v741, %v742
        %v746 = vsub.f32 %v718, %v743
        %v747 = vsub.f32 %v719, %v744
        %v748 = vsub.f32 %v720, %v745
        %v749 = vmul.f32 %v746, %v746
        %v750 = vmul.f32 %v747, %v747
        %v751 = vmul.f32 %v748, %v748
        %v752 = vsel %vm732, %v749, 0.0
        %753 = vadd.xlane.f32.xlu0 %v752
        %v754 = vpop.xlane.xlu0 %753
        %v755 = vsel %vm732, %v750, 0.0
        %756 = vadd.xlane.f32.xlu0 %v755
        %v757 = vpop.xlane.xlu0 %756
        %v758 = vsel %vm732, %v751, 0.0
        %759 = vadd.xlane.f32.xlu0 %v758
        %v760 = vpop.xlane.xlu0 %759
        %v761 = vmul.f32 %v754, %v742
        %v762 = vmul.f32 %v757, %v742
        %v763 = vmul.f32 %v760, %v742
        %v764 = vadd.f32 %v761, 1e-05
        %v765 = vadd.f32 %v762, 1e-05
        %v766 = vadd.f32 %v763, 1e-05
        %v767 = vrsqrt.pop %v764
        %v768 = vrsqrt.pop %v765
        %v769 = vrsqrt.pop %v766
        %v770 = vmul.f32 %v746, %v767
        %v771 = vmul.f32 %v747, %v768
        %v772 = vmul.f32 %v748, %v769
        %v774 = vlaneseq
        %v775 = vshrl.u32 %v774, 7
        %v776 = vsub.s32 0, %v775
        %v777 = vrot.slane %v729, %v776
        %v779 = vmul.f32 %v770, %v777
        %v780 = vmul.f32 %v771, %v777
        %v781 = vmul.f32 %v772, %v777
        %v783 = vlaneseq
        %v784 = vshrl.u32 %v783, 7
        %v785 = vsub.s32 0, %v784
        %v786 = vrot.slane %v731, %v785
        %v788 = vadd.f32 %v779, %v786
        %v789 = vadd.f32 %v780, %v786
        %v790 = vadd.f32 %v781, %v786
        %v791 = vpack.c.bf16 %v789, %v788
        %v792 = vpack.c.bf16 %v790, %v790
        %s793 = smul.u32 %s45, 4
        %s794 = smul.addr %s793, 4
        %s795 = scalar_lea.vmem [#allocation10], %s794
        %v796 = vld [vmem:[%s795] sm:$0xf]
        %v797 = vld [vmem:[%s795 + $0x4] sm:$0xf]
        %v798 = vld [vmem:[%s795 + $0x8] sm:$0xf]
        %v799 = vld [vmem:[%s795 + $0xc] sm:$0xf]
        %s800 = scalar_lea.vmem [#allocation11], %s45
        %v801 = vld [vmem:[%s800] sm:$0x1]
        %v803 = vlaneseq
        %v804 = vshrl.u32 %v803, 7
        %v805 = vsub.s32 0, %v804
        %v806 = vrot.slane %v801, %v805
        %v812 = vunpack.c.l.b16 %v796
        %v813 = vunpack.c.l.b16 %v797
        %v814 = vunpack.c.l.b16 %v798
        %v815 = vunpack.c.l.b16 %v799
        %v816 = vpack.c.b16 %v813, %v812
        %v817 = vpack.c.b16 %v815, %v814
        %v821 = vsel %vm732, %v791, 0
        %v824 = vsel %vm732, %v792, 0
        %826 = vmatprep.subr.bf16.mxu0 0
        %827 = vmatpush1.bf16.msra.mxu0 %v816
        %828 = vmatprep.subr.bf16.mxu0 0
        %829 = vmatpush1.bf16.msra.mxu0 %v817
        %830 = vmatprep.subr.bf16.mxu0 0
        %831 = vmatpush1.bf16.msra.mxu0 0
        %832 = vmatprep.subr.bf16.mxu0 0
        %833 = vmatpush1.bf16.msra.mxu0 0
        %834 = vmatprep.subr.bf16.mxu0 0
        %835 = vmatpush1.bf16.msra.mxu0 0
        %836 = vmatprep.subr.bf16.mxu0 0
        %837 = vmatpush1.bf16.msra.mxu0 0
        %838 = vmatprep.subr.bf16.mxu0 0
        %839 = vmatpush1.bf16.msra.mxu0 0
        %840 = vmatprep.subr.bf16.mxu0 0
        %841 = vmatpush1.bf16.msra.mxu0 0
        %842 = vmatprep.subr.bf16.mxu0 0
        %843 = vmatpush1.bf16.msra.mxu0 0
        %844 = vmatprep.subr.bf16.mxu0 0
        %845 = vmatpush1.bf16.msra.mxu0 0
        %846 = vmatprep.subr.bf16.mxu0 0
        %847 = vmatpush1.bf16.msra.mxu0 0
        %848 = vmatprep.subr.bf16.mxu0 0
        %849 = vmatpush1.bf16.msra.mxu0 0
        %850 = vmatprep.subr.bf16.mxu0 0
        %851 = vmatpush1.bf16.msra.mxu0 0
        %852 = vmatprep.subr.bf16.mxu0 0
        %853 = vmatpush1.bf16.msra.mxu0 0
        %854 = vmatprep.subr.bf16.mxu0 0
        %855 = vmatpush1.bf16.msra.mxu0 0
        %856 = vmatprep.subr.bf16.mxu0 0
        %857 = vmatpush1.bf16.msra.mxu0 0
        %858 = vmatprep.mubr.bf16.mxu0 0
        %859 = vmatmul.mubr.bf16.gmra.mrb[0].mxu0 %v821
        %v860 = vpop.f32.mrb[0].mxu0
        %v861 = vadd.f32 %v806, %v860
        %v862 = vpop.f32.mrb[0].mxu0
        %v863 = vpop.f32.mrb[0].mxu0
        %v864 = vadd.f32 %v806, %v863
        %v865 = vpop.f32.mrb[0].mxu0
        %866 = vmatprep.mubr.bf16.mxu0 0
        %867 = vmatmul.mubr.bf16.gmra.mrb[0].mxu0 %v824
        %v868 = vpop.f32.mrb[0].mxu0
        %v869 = vadd.f32 %v806, %v868
        %v870 = vpop.f32.mrb[0].mxu0
        %v871 = vpop.f32.mrb[0].mxu0
        %v872 = vpop.f32.mrb[0].mxu0
        %873 = vdwg.mxu0
        %v874 = vpack.c.bf16 %v864, %v861
        %v875 = vpack.c.bf16 %v869, %v869
        %878 = vrot.lane.b32.xlu0 %v874, 96
        %v879 = vpop.permute.xlu0 %878
        %880 = vrot.lane.b32.xlu0 %v875, 96
        %v881 = vpop.permute.xlu0 %880
        %vm882 = vcmask 64512
        %v884 = vsel %vm882, %v874, 0
        %v887 = vsel %vm882, %v875, 0
        %v890 = vsel %vm882, %v879, 0
        %v893 = vsel %vm882, %v881, 0
        %895 = vmatprep.subr.bf16.mxu0 0
        %896 = vmatpush1.bf16.xpose.msra.mxu0 %v890
        %897 = vmatprep.subr.bf16.mxu0 0
        %898 = vmatpush1.bf16.xpose.msra.mxu0 %v893
        %899 = vmatprep.subr.bf16.mxu0 0
        %900 = vmatpush1.bf16.xpose.msra.mxu0 0
        %901 = vmatprep.subr.bf16.mxu0 0
        %902 = vmatpush1.bf16.xpose.msra.mxu0 0
        %903 = vmatprep.subr.bf16.mxu0 0
        %904 = vmatpush1.bf16.xpose.msra.mxu0 0
        %905 = vmatprep.subr.bf16.mxu0 0
        %906 = vmatpush1.bf16.xpose.msra.mxu0 0
        %907 = vmatprep.subr.bf16.mxu0 0
        %908 = vmatpush1.bf16.xpose.msra.mxu0 0
        %909 = vmatprep.subr.bf16.mxu0 0
        %910 = vmatpush1.bf16.xpose.msra.mxu0 0
        %911 = vmatprep.subr.bf16.mxu0 0
        %912 = vmatpush1.bf16.xpose.msra.mxu0 0
        %913 = vmatprep.subr.bf16.mxu0 0
        %914 = vmatpush1.bf16.xpose.msra.mxu0 0
        %915 = vmatprep.subr.bf16.mxu0 0
        %916 = vmatpush1.bf16.xpose.msra.mxu0 0
        %917 = vmatprep.subr.bf16.mxu0 0
        %918 = vmatpush1.bf16.xpose.msra.mxu0 0
        %919 = vmatprep.subr.bf16.mxu0 0
        %920 = vmatpush1.bf16.xpose.msra.mxu0 0
        %921 = vmatprep.subr.bf16.mxu0 0
        %922 = vmatpush1.bf16.xpose.msra.mxu0 0
        %923 = vmatprep.subr.bf16.mxu0 0
        %924 = vmatpush1.bf16.xpose.msra.mxu0 0
        %925 = vmatprep.subr.bf16.mxu0 0
        %926 = vmatpush1.bf16.xpose.msra.mxu0 0
        %927 = vmatprep.mubr.bf16.mxu0 0
        %928 = vmatmul.mubr.bf16.gmra.mrb[0].mxu0 %v884
        %v929 = vpop.f32.mrb[0].mxu0
        %v930 = vadd.f32 %v726, %v929
        %v931 = vpop.f32.mrb[0].mxu0
        %v932 = vpop.f32.mrb[0].mxu0
        %v933 = vadd.f32 %v726, %v932
        %v934 = vpop.f32.mrb[0].mxu0
        %935 = vmatprep.mubr.bf16.mxu0 0
        %936 = vmatmul.mubr.bf16.gmra.mrb[0].mxu0 %v887
        %v937 = vpop.f32.mrb[0].mxu0
        %v938 = vadd.f32 %v726, %v937
        %v939 = vpop.f32.mrb[0].mxu0
        %v940 = vpop.f32.mrb[0].mxu0
        %v941 = vpop.f32.mrb[0].mxu0
        %942 = vdwg.mxu0
        %vm943 = vcmask 195584
        %v944 = vsel %vm943, %v930, -inf
        %945 = vmax.xlane.f32.xlu0 %v944
        %v946 = vpop.xlane.xlu0 %945
        %v947 = vsel %vm943, %v933, -inf
        %948 = vmax.xlane.f32.xlu0 %v947
        %v949 = vpop.xlane.xlu0 %948
        %v950 = vsel %vm943, %v938, -inf
        %951 = vmax.xlane.f32.xlu0 %v950
        %v952 = vpop.xlane.xlu0 %951
        %v953 = vsub.f32 %v930, %v946
        %v954 = vsub.f32 %v933, %v949
        %v955 = vsub.f32 %v938, %v952
        %v956 = vmul.f32 %v953, 1.442695
        %v957 = vpow.pop %v956
        %v958 = vmul.f32 %v954, 1.442695
        %v959 = vpow.pop %v958
        %v960 = vmul.f32 %v955, 1.442695
        %v961 = vpow.pop %v960
        %v962 = vsel %vm943, %v957, 0.0
        %963 = vadd.xlane.f32.xlu0 %v962
        %v964 = vpop.xlane.xlu0 %963
        %v965 = vsel %vm943, %v959, 0.0
        %966 = vadd.xlane.f32.xlu0 %v965
        %v967 = vpop.xlane.xlu0 %966
        %v968 = vsel %vm943, %v961, 0.0
        %969 = vadd.xlane.f32.xlu0 %v968
        %v970 = vpop.xlane.xlu0 %969
        %v971 = vrcp.pop %v964
        %v972 = vrcp.pop %v967
        %v973 = vrcp.pop %v970
        %v974 = vmul.f32 %v957, %v971
        %v975 = vmul.f32 %v959, %v972
        %v976 = vmul.f32 %v961, %v973
        %v977 = vpack.c.bf16 %v975, %v974
        %v978 = vpack.c.bf16 %v976, %v976
        %979 = vrot.lane.b32.xlu0 %v874, 64
        %v980 = vpop.permute.xlu0 %979
        %981 = vrot.lane.b32.xlu0 %v875, 64
        %v982 = vpop.permute.xlu0 %981
        %v985 = vsel %vm943, %v977, 0
        %v988 = vsel %vm943, %v978, 0
        %vm990 = vcmask 1043456
        %v992 = vsel %vm990, %v982, 0
        %994 = vmatprep.subr.bf16.mxu0 0
        %995 = vmatpush1.bf16.msra.mxu0 %v980
        %996 = vmatprep.subr.bf16.mxu0 0
        %997 = vmatpush1.bf16.msra.mxu0 %v992
        %998 = vmatprep.subr.bf16.mxu0 0
        %999 = vmatpush1.bf16.msra.mxu0 0
        %1000 = vmatprep.subr.bf16.mxu0 0
        %1001 = vmatpush1.bf16.msra.mxu0 0
        %1002 = vmatprep.subr.bf16.mxu0 0
        %1003 = vmatpush1.bf16.msra.mxu0 0
        %1004 = vmatprep.subr.bf16.mxu0 0
        %1005 = vmatpush1.bf16.msra.mxu0 0
        %1006 = vmatprep.subr.bf16.mxu0 0
        %1007 = vmatpush1.bf16.msra.mxu0 0
        %1008 = vmatprep.subr.bf16.mxu0 0
        %1009 = vmatpush1.bf16.msra.mxu0 0
        %1010 = vmatprep.subr.bf16.mxu0 0
        %1011 = vmatpush1.bf16.msra.mxu0 0
        %1012 = vmatprep.subr.bf16.mxu0 0
        %1013 = vmatpush1.bf16.msra.mxu0 0
        %1014 = vmatprep.subr.bf16.mxu0 0
        %1015 = vmatpush1.bf16.msra.mxu0 0
        %1016 = vmatprep.subr.bf16.mxu0 0
        %1017 = vmatpush1.bf16.msra.mxu0 0
        %1018 = vmatprep.subr.bf16.mxu0 0
        %1019 = vmatpush1.bf16.msra.mxu0 0
        %1020 = vmatprep.subr.bf16.mxu0 0
        %1021 = vmatpush1.bf16.msra.mxu0 0
        %1022 = vmatprep.subr.bf16.mxu0 0
        %1023 = vmatpush1.bf16.msra.mxu0 0
        %1024 = vmatprep.subr.bf16.mxu0 0
        %1025 = vmatpush1.bf16.msra.mxu0 0
        %1026 = vmatprep.mubr.bf16.mxu0 0
        %1027 = vmatmul.mubr.bf16.gmra.mrb[0].mxu0 %v985
        %v1028 = vpop.f32.mrb[0].mxu0
        %v1029 = vadd.f32 0.0, %v1028
        %v1030 = vpop.f32.mrb[0].mxu0
        %v1031 = vpop.f32.mrb[0].mxu0
        %v1032 = vadd.f32 0.0, %v1031
        %v1033 = vpop.f32.mrb[0].mxu0
        %1034 = vmatprep.mubr.bf16.mxu0 0
        %1035 = vmatmul.mubr.bf16.gmra.mrb[0].mxu0 %v988
        %v1036 = vpop.f32.mrb[0].mxu0
        %v1037 = vadd.f32 0.0, %v1036
        %v1038 = vpop.f32.mrb[0].mxu0
        %v1039 = vpop.f32.mrb[0].mxu0
        %v1040 = vpop.f32.mrb[0].mxu0
        %1041 = vdwg.mxu0
        %v1042 = vpack.c.bf16 %v1032, %v1029
        %v1043 = vpack.c.bf16 %v1037, %v1037
        %1044 = vrot.lane.b32.xlu0 %v874, 120
        %v1045 = vpop.permute.xlu0 %1044
        %1046 = vrot.lane.b32.xlu0 %v875, 120
        %v1047 = vpop.permute.xlu0 %1046
        %1048 = vrot.lane.b32.xlu0 %v874, 88
        %v1049 = vpop.permute.xlu0 %1048
        %1050 = vrot.lane.b32.xlu0 %v875, 88
        %v1051 = vpop.permute.xlu0 %1050
        %v1053 = vsel %vm882, %v1045, 0
        %v1056 = vsel %vm882, %v1047, 0
        %v1059 = vsel %vm882, %v1049, 0
        %v1062 = vsel %vm882, %v1051, 0
        %1064 = vmatprep.subr.bf16.mxu0 0
        %1065 = vmatpush1.bf16.xpose.msra.mxu0 %v1059
        %1066 = vmatprep.subr.bf16.mxu0 0
        %1067 = vmatpush1.bf16.xpose.msra.mxu0 %v1062
        %1068 = vmatprep.subr.bf16.mxu0 0
        %1069 = vmatpush1.bf16.xpose.msra.mxu0 0
        %1070 = vmatprep.subr.bf16.mxu0 0
        %1071 = vmatpush1.bf16.xpose.msra.mxu0 0
        %1072 = vmatprep.subr.bf16.mxu0 0
        %1073 = vmatpush1.bf16.xpose.msra.mxu0 0
        %1074 = vmatprep.subr.bf16.mxu0 0
        %1075 = vmatpush1.bf16.xpose.msra.mxu0 0
        %1076 = vmatprep.subr.bf16.mxu0 0
        %1077 = vmatpush1.bf16.xpose.msra.mxu0 0
        %1078 = vmatprep.subr.bf16.mxu0 0
        %1079 = vmatpush1.bf16.xpose.msra.mxu0 0
        %1080 = vmatprep.subr.bf16.mxu0 0
        %1081 = vmatpush1.bf16.xpose.msra.mxu0 0
        %1082 = vmatprep.subr.bf16.mxu0 0
        %1083 = vmatpush1.bf16.xpose.msra.mxu0 0
        %1084 = vmatprep.subr.bf16.mxu0 0
        %1085 = vmatpush1.bf16.xpose.msra.mxu0 0
        %1086 = vmatprep.subr.bf16.mxu0 0
        %1087 = vmatpush1.bf16.xpose.msra.mxu0 0
        %1088 = vmatprep.subr.bf16.mxu0 0
        %1089 = vmatpush1.bf16.xpose.msra.mxu0 0
        %1090 = vmatprep.subr.bf16.mxu0 0
        %1091 = vmatpush1.bf16.xpose.msra.mxu0 0
        %1092 = vmatprep.subr.bf16.mxu0 0
        %1093 = vmatpush1.bf16.xpose.msra.mxu0 0
        %1094 = vmatprep.subr.bf16.mxu0 0
        %1095 = vmatpush1.bf16.xpose.msra.mxu0 0
        %1096 = vmatprep.mubr.bf16.mxu0 0
        %1097 = vmatmul.mubr.bf16.gmra.mrb[0].mxu0 %v1053
        %v1098 = vpop.f32.mrb[0].mxu0
        %v1099 = vadd.f32 %v726, %v1098
        %v1100 = vpop.f32.mrb[0].mxu0
        %v1101 = vpop.f32.mrb[0].mxu0
        %v1102 = vadd.f32 %v726, %v1101
        %v1103 = vpop.f32.mrb[0].mxu0
        %1104 = vmatprep.mubr.bf16.mxu0 0
        %1105 = vmatmul.mubr.bf16.gmra.mrb[0].mxu0 %v1056
        %v1106 = vpop.f32.mrb[0].mxu0
        %v1107 = vadd.f32 %v726, %v1106
        %v1108 = vpop.f32.mrb[0].mxu0
        %v1109 = vpop.f32.mrb[0].mxu0
        %v1110 = vpop.f32.mrb[0].mxu0
        %1111 = vdwg.mxu0
        %v1112 = vsel %vm943, %v1099, -inf
        %1113 = vmax.xlane.f32.xlu0 %v1112
        %v1114 = vpop.xlane.xlu0 %1113
        %v1115 = vsel %vm943, %v1102, -inf
        %1116 = vmax.xlane.f32.xlu0 %v1115
        %v1117 = vpop.xlane.xlu0 %1116
        %v1118 = vsel %vm943, %v1107, -inf
        %1119 = vmax.xlane.f32.xlu0 %v1118
        %v1120 = vpop.xlane.xlu0 %1119
        %v1121 = vsub.f32 %v1099, %v1114
        %v1122 = vsub.f32 %v1102, %v1117
        %v1123 = vsub.f32 %v1107, %v1120
        %v1124 = vmul.f32 %v1121, 1.442695
        %v1125 = vpow.pop %v1124
        %v1126 = vmul.f32 %v1122, 1.442695
        %v1127 = vpow.pop %v1126
        %v1128 = vmul.f32 %v1123, 1.442695
        %v1129 = vpow.pop %v1128
        %v1130 = vsel %vm943, %v1125, 0.0
        %1131 = vadd.xlane.f32.xlu0 %v1130
        %v1132 = vpop.xlane.xlu0 %1131
        %v1133 = vsel %vm943, %v1127, 0.0
        %1134 = vadd.xlane.f32.xlu0 %v1133
        %v1135 = vpop.xlane.xlu0 %1134
        %v1136 = vsel %vm943, %v1129, 0.0
        %1137 = vadd.xlane.f32.xlu0 %v1136
        %v1138 = vpop.xlane.xlu0 %1137
        %v1139 = vrcp.pop %v1132
        %v1140 = vrcp.pop %v1135
        %v1141 = vrcp.pop %v1138
        %v1142 = vmul.f32 %v1125, %v1139
        %v1143 = vmul.f32 %v1127, %v1140
        %v1144 = vmul.f32 %v1129, %v1141
        %v1145 = vpack.c.bf16 %v1143, %v1142
        %v1146 = vpack.c.bf16 %v1144, %v1144
        %1147 = vrot.lane.b32.xlu0 %v874, 56
        %v1148 = vpop.permute.xlu0 %1147
        %1149 = vrot.lane.b32.xlu0 %v875, 56
        %v1150 = vpop.permute.xlu0 %1149
        %v1153 = vsel %vm943, %v1145, 0
        %v1156 = vsel %vm943, %v1146, 0
        %v1159 = vsel %vm990, %v1150, 0
        %1161 = vmatprep.subr.bf16.mxu0 0
        %1162 = vmatpush1.bf16.msra.mxu0 %v1148
        %1163 = vmatprep.subr.bf16.mxu0 0
        %1164 = vmatpush1.bf16.msra.mxu0 %v1159
        %1165 = vmatprep.subr.bf16.mxu0 0
        %1166 = vmatpush1.bf16.msra.mxu0 0
        %1167 = vmatprep.subr.bf16.mxu0 0
        %1168 = vmatpush1.bf16.msra.mxu0 0
        %1169 = vmatprep.subr.bf16.mxu0 0
        %1170 = vmatpush1.bf16.msra.mxu0 0
        %1171 = vmatprep.subr.bf16.mxu0 0
        %1172 = vmatpush1.bf16.msra.mxu0 0
        %1173 = vmatprep.subr.bf16.mxu0 0
        %1174 = vmatpush1.bf16.msra.mxu0 0
        %1175 = vmatprep.subr.bf16.mxu0 0
        %1176 = vmatpush1.bf16.msra.mxu0 0
        %1177 = vmatprep.subr.bf16.mxu0 0
        %1178 = vmatpush1.bf16.msra.mxu0 0
        %1179 = vmatprep.subr.bf16.mxu0 0
        %1180 = vmatpush1.bf16.msra.mxu0 0
        %1181 = vmatprep.subr.bf16.mxu0 0
        %1182 = vmatpush1.bf16.msra.mxu0 0
        %1183 = vmatprep.subr.bf16.mxu0 0
        %1184 = vmatpush1.bf16.msra.mxu0 0
        %1185 = vmatprep.subr.bf16.mxu0 0
        %1186 = vmatpush1.bf16.msra.mxu0 0
        %1187 = vmatprep.subr.bf16.mxu0 0
        %1188 = vmatpush1.bf16.msra.mxu0 0
        %1189 = vmatprep.subr.bf16.mxu0 0
        %1190 = vmatpush1.bf16.msra.mxu0 0
        %1191 = vmatprep.subr.bf16.mxu0 0
        %1192 = vmatpush1.bf16.msra.mxu0 0
        %1193 = vmatprep.mubr.bf16.mxu0 0
        %1194 = vmatmul.mubr.bf16.gmra.mrb[0].mxu0 %v1153
        %v1195 = vpop.f32.mrb[0].mxu0
        %v1196 = vadd.f32 0.0, %v1195
        %v1197 = vpop.f32.mrb[0].mxu0
        %v1198 = vpop.f32.mrb[0].mxu0
        %v1199 = vadd.f32 0.0, %v1198
        %v1200 = vpop.f32.mrb[0].mxu0
        %1201 = vmatprep.mubr.bf16.mxu0 0
        %1202 = vmatmul.mubr.bf16.gmra.mrb[0].mxu0 %v1156
        %v1203 = vpop.f32.mrb[0].mxu0
        %v1204 = vadd.f32 0.0, %v1203
        %v1205 = vpop.f32.mrb[0].mxu0
        %v1206 = vpop.f32.mrb[0].mxu0
        %v1207 = vpop.f32.mrb[0].mxu0
        %1208 = vdwg.mxu0
        %v1209 = vpack.c.bf16 %v1199, %v1196
        %v1210 = vpack.c.bf16 %v1204, %v1204
        %1211 = vrot.lane.b32.xlu0 %v874, 112
        %v1212 = vpop.permute.xlu0 %1211
        %1213 = vrot.lane.b32.xlu0 %v875, 112
        %v1214 = vpop.permute.xlu0 %1213
        %1215 = vrot.lane.b32.xlu0 %v874, 80
        %v1216 = vpop.permute.xlu0 %1215
        %1217 = vrot.lane.b32.xlu0 %v875, 80
        %v1218 = vpop.permute.xlu0 %1217
        %v1220 = vsel %vm882, %v1212, 0
        %v1223 = vsel %vm882, %v1214, 0
        %v1226 = vsel %vm882, %v1216, 0
        %v1229 = vsel %vm882, %v1218, 0
        %1231 = vmatprep.subr.bf16.mxu0 0
        %1232 = vmatpush1.bf16.xpose.msra.mxu0 %v1226
        %1233 = vmatprep.subr.bf16.mxu0 0
        %1234 = vmatpush1.bf16.xpose.msra.mxu0 %v1229
        %1235 = vmatprep.subr.bf16.mxu0 0
        %1236 = vmatpush1.bf16.xpose.msra.mxu0 0
        %1237 = vmatprep.subr.bf16.mxu0 0
        %1238 = vmatpush1.bf16.xpose.msra.mxu0 0
        %1239 = vmatprep.subr.bf16.mxu0 0
        %1240 = vmatpush1.bf16.xpose.msra.mxu0 0
        %1241 = vmatprep.subr.bf16.mxu0 0
        %1242 = vmatpush1.bf16.xpose.msra.mxu0 0
        %1243 = vmatprep.subr.bf16.mxu0 0
        %1244 = vmatpush1.bf16.xpose.msra.mxu0 0
        %1245 = vmatprep.subr.bf16.mxu0 0
        %1246 = vmatpush1.bf16.xpose.msra.mxu0 0
        %1247 = vmatprep.subr.bf16.mxu0 0
        %1248 = vmatpush1.bf16.xpose.msra.mxu0 0
        %1249 = vmatprep.subr.bf16.mxu0 0
        %1250 = vmatpush1.bf16.xpose.msra.mxu0 0
        %1251 = vmatprep.subr.bf16.mxu0 0
        %1252 = vmatpush1.bf16.xpose.msra.mxu0 0
        %1253 = vmatprep.subr.bf16.mxu0 0
        %1254 = vmatpush1.bf16.xpose.msra.mxu0 0
        %1255 = vmatprep.subr.bf16.mxu0 0
        %1256 = vmatpush1.bf16.xpose.msra.mxu0 0
        %1257 = vmatprep.subr.bf16.mxu0 0
        %1258 = vmatpush1.bf16.xpose.msra.mxu0 0
        %1259 = vmatprep.subr.bf16.mxu0 0
        %1260 = vmatpush1.bf16.xpose.msra.mxu0 0
        %1261 = vmatprep.subr.bf16.mxu0 0
        %1262 = vmatpush1.bf16.xpose.msra.mxu0 0
        %1263 = vmatprep.mubr.bf16.mxu0 0
        %1264 = vmatmul.mubr.bf16.gmra.mrb[0].mxu0 %v1220
        %v1265 = vpop.f32.mrb[0].mxu0
        %v1266 = vadd.f32 %v726, %v1265
        %v1267 = vpop.f32.mrb[0].mxu0
        %v1268 = vpop.f32.mrb[0].mxu0
        %v1269 = vadd.f32 %v726, %v1268
        %v1270 = vpop.f32.mrb[0].mxu0
        %1271 = vmatprep.mubr.bf16.mxu0 0
        %1272 = vmatmul.mubr.bf16.gmra.mrb[0].mxu0 %v1223
        %v1273 = vpop.f32.mrb[0].mxu0
        %v1274 = vadd.f32 %v726, %v1273
        %v1275 = vpop.f32.mrb[0].mxu0
        %v1276 = vpop.f32.mrb[0].mxu0
        %v1277 = vpop.f32.mrb[0].mxu0
        %1278 = vdwg.mxu0
        %v1279 = vsel %vm943, %v1266, -inf
        %1280 = vmax.xlane.f32.xlu0 %v1279
        %v1281 = vpop.xlane.xlu0 %1280
        %v1282 = vsel %vm943, %v1269, -inf
        %1283 = vmax.xlane.f32.xlu0 %v1282
        %v1284 = vpop.xlane.xlu0 %1283
        %v1285 = vsel %vm943, %v1274, -inf
        %1286 = vmax.xlane.f32.xlu0 %v1285
        %v1287 = vpop.xlane.xlu0 %1286
        %v1288 = vsub.f32 %v1266, %v1281
        %v1289 = vsub.f32 %v1269, %v1284
        %v1290 = vsub.f32 %v1274, %v1287
        %v1291 = vmul.f32 %v1288, 1.442695
        %v1292 = vpow.pop %v1291
        %v1293 = vmul.f32 %v1289, 1.442695
        %v1294 = vpow.pop %v1293
        %v1295 = vmul.f32 %v1290, 1.442695
        %v1296 = vpow.pop %v1295
        %v1297 = vsel %vm943, %v1292, 0.0
        %1298 = vadd.xlane.f32.xlu0 %v1297
        %v1299 = vpop.xlane.xlu0 %1298
        %v1300 = vsel %vm943, %v1294, 0.0
        %1301 = vadd.xlane.f32.xlu0 %v1300
        %v1302 = vpop.xlane.xlu0 %1301
        %v1303 = vsel %vm943, %v1296, 0.0
        %1304 = vadd.xlane.f32.xlu0 %v1303
        %v1305 = vpop.xlane.xlu0 %1304
        %v1306 = vrcp.pop %v1299
        %v1307 = vrcp.pop %v1302
        %v1308 = vrcp.pop %v1305
        %v1309 = vmul.f32 %v1292, %v1306
        %v1310 = vmul.f32 %v1294, %v1307
        %v1311 = vmul.f32 %v1296, %v1308
        %v1312 = vpack.c.bf16 %v1310, %v1309
        %v1313 = vpack.c.bf16 %v1311, %v1311
        %1314 = vrot.lane.b32.xlu0 %v874, 48
        %v1315 = vpop.permute.xlu0 %1314
        %1316 = vrot.lane.b32.xlu0 %v875, 48
        %v1317 = vpop.permute.xlu0 %1316
        %v1320 = vsel %vm943, %v1312, 0
        %v1323 = vsel %vm943, %v1313, 0
        %v1326 = vsel %vm990, %v1317, 0
        %1328 = vmatprep.subr.bf16.mxu0 0
        %1329 = vmatpush1.bf16.msra.mxu0 %v1315
        %1330 = vmatprep.subr.bf16.mxu0 0
        %1331 = vmatpush1.bf16.msra.mxu0 %v1326
        %1332 = vmatprep.subr.bf16.mxu0 0
        %1333 = vmatpush1.bf16.msra.mxu0 0
        %1334 = vmatprep.subr.bf16.mxu0 0
        %1335 = vmatpush1.bf16.msra.mxu0 0
        %1336 = vmatprep.subr.bf16.mxu0 0
        %1337 = vmatpush1.bf16.msra.mxu0 0
        %1338 = vmatprep.subr.bf16.mxu0 0
        %1339 = vmatpush1.bf16.msra.mxu0 0
        %1340 = vmatprep.subr.bf16.mxu0 0
        %1341 = vmatpush1.bf16.msra.mxu0 0
        %1342 = vmatprep.subr.bf16.mxu0 0
        %1343 = vmatpush1.bf16.msra.mxu0 0
        %1344 = vmatprep.subr.bf16.mxu0 0
        %1345 = vmatpush1.bf16.msra.mxu0 0
        %1346 = vmatprep.subr.bf16.mxu0 0
        %1347 = vmatpush1.bf16.msra.mxu0 0
        %1348 = vmatprep.subr.bf16.mxu0 0
        %1349 = vmatpush1.bf16.msra.mxu0 0
        %1350 = vmatprep.subr.bf16.mxu0 0
        %1351 = vmatpush1.bf16.msra.mxu0 0
        %1352 = vmatprep.subr.bf16.mxu0 0
        %1353 = vmatpush1.bf16.msra.mxu0 0
        %1354 = vmatprep.subr.bf16.mxu0 0
        %1355 = vmatpush1.bf16.msra.mxu0 0
        %1356 = vmatprep.subr.bf16.mxu0 0
        %1357 = vmatpush1.bf16.msra.mxu0 0
        %1358 = vmatprep.subr.bf16.mxu0 0
        %1359 = vmatpush1.bf16.msra.mxu0 0
        %1360 = vmatprep.mubr.bf16.mxu0 0
        %1361 = vmatmul.mubr.bf16.gmra.mrb[0].mxu0 %v1320
        %v1362 = vpop.f32.mrb[0].mxu0
        %v1363 = vadd.f32 0.0, %v1362
        %v1364 = vpop.f32.mrb[0].mxu0
        %v1365 = vpop.f32.mrb[0].mxu0
        %v1366 = vadd.f32 0.0, %v1365
        %v1367 = vpop.f32.mrb[0].mxu0
        %1368 = vmatprep.mubr.bf16.mxu0 0
        %1369 = vmatmul.mubr.bf16.gmra.mrb[0].mxu0 %v1323
        %v1370 = vpop.f32.mrb[0].mxu0
        %v1371 = vadd.f32 0.0, %v1370
        %v1372 = vpop.f32.mrb[0].mxu0
        %v1373 = vpop.f32.mrb[0].mxu0
        %v1374 = vpop.f32.mrb[0].mxu0
        %1375 = vdwg.mxu0
        %v1376 = vpack.c.bf16 %v1366, %v1363
        %v1377 = vpack.c.bf16 %v1371, %v1371
        %1378 = vrot.lane.b32.xlu0 %v874, 104
        %v1379 = vpop.permute.xlu0 %1378
        %1380 = vrot.lane.b32.xlu0 %v875, 104
        %v1381 = vpop.permute.xlu0 %1380
        %1382 = vrot.lane.b32.xlu0 %v874, 72
        %v1383 = vpop.permute.xlu0 %1382
        %1384 = vrot.lane.b32.xlu0 %v875, 72
        %v1385 = vpop.permute.xlu0 %1384
        %v1387 = vsel %vm882, %v1379, 0
        %v1390 = vsel %vm882, %v1381, 0
        %v1393 = vsel %vm882, %v1383, 0
        %v1396 = vsel %vm882, %v1385, 0
        %1398 = vmatprep.subr.bf16.mxu0 0
        %1399 = vmatpush1.bf16.xpose.msra.mxu0 %v1393
        %1400 = vmatprep.subr.bf16.mxu0 0
        %1401 = vmatpush1.bf16.xpose.msra.mxu0 %v1396
        %1402 = vmatprep.subr.bf16.mxu0 0
        %1403 = vmatpush1.bf16.xpose.msra.mxu0 0
        %1404 = vmatprep.subr.bf16.mxu0 0
        %1405 = vmatpush1.bf16.xpose.msra.mxu0 0
        %1406 = vmatprep.subr.bf16.mxu0 0
        %1407 = vmatpush1.bf16.xpose.msra.mxu0 0
        %1408 = vmatprep.subr.bf16.mxu0 0
        %1409 = vmatpush1.bf16.xpose.msra.mxu0 0
        %1410 = vmatprep.subr.bf16.mxu0 0
        %1411 = vmatpush1.bf16.xpose.msra.mxu0 0
        %1412 = vmatprep.subr.bf16.mxu0 0
        %1413 = vmatpush1.bf16.xpose.msra.mxu0 0
        %1414 = vmatprep.subr.bf16.mxu0 0
        %1415 = vmatpush1.bf16.xpose.msra.mxu0 0
        %1416 = vmatprep.subr.bf16.mxu0 0
        %1417 = vmatpush1.bf16.xpose.msra.mxu0 0
        %1418 = vmatprep.subr.bf16.mxu0 0
        %1419 = vmatpush1.bf16.xpose.msra.mxu0 0
        %1420 = vmatprep.subr.bf16.mxu0 0
        %1421 = vmatpush1.bf16.xpose.msra.mxu0 0
        %1422 = vmatprep.subr.bf16.mxu0 0
        %1423 = vmatpush1.bf16.xpose.msra.mxu0 0
        %1424 = vmatprep.subr.bf16.mxu0 0
        %1425 = vmatpush1.bf16.xpose.msra.mxu0 0
        %1426 = vmatprep.subr.bf16.mxu0 0
        %1427 = vmatpush1.bf16.xpose.msra.mxu0 0
        %1428 = vmatprep.subr.bf16.mxu0 0
        %1429 = vmatpush1.bf16.xpose.msra.mxu0 0
        %1430 = vmatprep.mubr.bf16.mxu0 0
        %1431 = vmatmul.mubr.bf16.gmra.mrb[0].mxu0 %v1387
        %v1432 = vpop.f32.mrb[0].mxu0
        %v1433 = vadd.f32 %v726, %v1432
        %v1434 = vpop.f32.mrb[0].mxu0
        %v1435 = vpop.f32.mrb[0].mxu0
        %v1436 = vadd.f32 %v726, %v1435
        %v1437 = vpop.f32.mrb[0].mxu0
        %1438 = vmatprep.mubr.bf16.mxu0 0
        %1439 = vmatmul.mubr.bf16.gmra.mrb[0].mxu0 %v1390
        %v1440 = vpop.f32.mrb[0].mxu0
        %v1441 = vadd.f32 %v726, %v1440
        %v1442 = vpop.f32.mrb[0].mxu0
        %v1443 = vpop.f32.mrb[0].mxu0
        %v1444 = vpop.f32.mrb[0].mxu0
        %1445 = vdwg.mxu0
        %v1446 = vsel %vm943, %v1433, -inf
        %1447 = vmax.xlane.f32.xlu0 %v1446
        %v1448 = vpop.xlane.xlu0 %1447
        %v1449 = vsel %vm943, %v1436, -inf
        %1450 = vmax.xlane.f32.xlu0 %v1449
        %v1451 = vpop.xlane.xlu0 %1450
        %v1452 = vsel %vm943, %v1441, -inf
        %1453 = vmax.xlane.f32.xlu0 %v1452
        %v1454 = vpop.xlane.xlu0 %1453
        %v1455 = vsub.f32 %v1433, %v1448
        %v1456 = vsub.f32 %v1436, %v1451
        %v1457 = vsub.f32 %v1441, %v1454
        %v1458 = vmul.f32 %v1455, 1.442695
        %v1459 = vpow.pop %v1458
        %v1460 = vmul.f32 %v1456, 1.442695
        %v1461 = vpow.pop %v1460
        %v1462 = vmul.f32 %v1457, 1.442695
        %v1463 = vpow.pop %v1462
        %v1464 = vsel %vm943, %v1459, 0.0
        %1465 = vadd.xlane.f32.xlu0 %v1464
        %v1466 = vpop.xlane.xlu0 %1465
        %v1467 = vsel %vm943, %v1461, 0.0
        %1468 = vadd.xlane.f32.xlu0 %v1467
        %v1469 = vpop.xlane.xlu0 %1468
        %v1470 = vsel %vm943, %v1463, 0.0
        %1471 = vadd.xlane.f32.xlu0 %v1470
        %v1472 = vpop.xlane.xlu0 %1471
        %v1473 = vrcp.pop %v1466
        %v1474 = vrcp.pop %v1469
        %v1475 = vrcp.pop %v1472
        %v1476 = vmul.f32 %v1459, %v1473
        %v1477 = vmul.f32 %v1461, %v1474
        %v1478 = vmul.f32 %v1463, %v1475
        %v1479 = vpack.c.bf16 %v1477, %v1476
        %v1480 = vpack.c.bf16 %v1478, %v1478
        %1481 = vrot.lane.b32.xlu0 %v874, 40
        %v1482 = vpop.permute.xlu0 %1481
        %1483 = vrot.lane.b32.xlu0 %v875, 40
        %v1484 = vpop.permute.xlu0 %1483
        %v1487 = vsel %vm943, %v1479, 0
        %v1490 = vsel %vm943, %v1480, 0
        %v1493 = vsel %vm990, %v1484, 0
        %1495 = vmatprep.subr.bf16.mxu0 0
        %1496 = vmatpush1.bf16.msra.mxu0 %v1482
        %1497 = vmatprep.subr.bf16.mxu0 0
        %1498 = vmatpush1.bf16.msra.mxu0 %v1493
        %1499 = vmatprep.subr.bf16.mxu0 0
        %1500 = vmatpush1.bf16.msra.mxu0 0
        %1501 = vmatprep.subr.bf16.mxu0 0
        %1502 = vmatpush1.bf16.msra.mxu0 0
        %1503 = vmatprep.subr.bf16.mxu0 0
        %1504 = vmatpush1.bf16.msra.mxu0 0
        %1505 = vmatprep.subr.bf16.mxu0 0
        %1506 = vmatpush1.bf16.msra.mxu0 0
        %1507 = vmatprep.subr.bf16.mxu0 0
        %1508 = vmatpush1.bf16.msra.mxu0 0
        %1509 = vmatprep.subr.bf16.mxu0 0
        %1510 = vmatpush1.bf16.msra.mxu0 0
        %1511 = vmatprep.subr.bf16.mxu0 0
        %1512 = vmatpush1.bf16.msra.mxu0 0
        %1513 = vmatprep.subr.bf16.mxu0 0
        %1514 = vmatpush1.bf16.msra.mxu0 0
        %1515 = vmatprep.subr.bf16.mxu0 0
        %1516 = vmatpush1.bf16.msra.mxu0 0
        %1517 = vmatprep.subr.bf16.mxu0 0
        %1518 = vmatpush1.bf16.msra.mxu0 0
        %1519 = vmatprep.subr.bf16.mxu0 0
        %1520 = vmatpush1.bf16.msra.mxu0 0
        %1521 = vmatprep.subr.bf16.mxu0 0
        %1522 = vmatpush1.bf16.msra.mxu0 0
        %1523 = vmatprep.subr.bf16.mxu0 0
        %1524 = vmatpush1.bf16.msra.mxu0 0
        %1525 = vmatprep.subr.bf16.mxu0 0
        %1526 = vmatpush1.bf16.msra.mxu0 0
        %1527 = vmatprep.mubr.bf16.mxu0 0
        %1528 = vmatmul.mubr.bf16.gmra.mrb[0].mxu0 %v1487
        %v1529 = vpop.f32.mrb[0].mxu0
        %v1530 = vadd.f32 0.0, %v1529
        %v1531 = vpop.f32.mrb[0].mxu0
        %v1532 = vpop.f32.mrb[0].mxu0
        %v1533 = vadd.f32 0.0, %v1532
        %v1534 = vpop.f32.mrb[0].mxu0
        %1535 = vmatprep.mubr.bf16.mxu0 0
        %1536 = vmatmul.mubr.bf16.gmra.mrb[0].mxu0 %v1490
        %v1537 = vpop.f32.mrb[0].mxu0
        %v1538 = vadd.f32 0.0, %v1537
        %v1539 = vpop.f32.mrb[0].mxu0
        %v1540 = vpop.f32.mrb[0].mxu0
        %v1541 = vpop.f32.mrb[0].mxu0
        %1542 = vdwg.mxu0
        %v1543 = vpack.c.bf16 %v1533, %v1530
        %v1544 = vpack.c.bf16 %v1538, %v1538
        %1547 = vrot.lane.b32.xlu0 %v1209, 8
        %v1548 = vpop.permute.xlu0 %1547
        %1549 = vrot.lane.b32.xlu0 %v1210, 8
        %v1550 = vpop.permute.xlu0 %1549
        %1553 = vrot.lane.b32.xlu0 %v1376, 16
        %v1554 = vpop.permute.xlu0 %1553
        %1555 = vrot.lane.b32.xlu0 %v1377, 16
        %v1556 = vpop.permute.xlu0 %1555
        %1559 = vrot.lane.b32.xlu0 %v1543, 24
        %v1560 = vpop.permute.xlu0 %1559
        %1561 = vrot.lane.b32.xlu0 %v1544, 24
        %v1562 = vpop.permute.xlu0 %1561
        %v1565 = vsel %vm882, %v1042, %v1548
        %v1568 = vsel %vm882, %v1043, %v1550
        %vm1569 = vcmask 130048
        %v1571 = vsel %vm1569, %v1565, %v1554
        %v1573 = vsel %vm1569, %v1568, %v1556
        %v1575 = vsel %vm943, %v1571, %v1560
        %v1577 = vsel %vm943, %v1573, %v1562
        %s1578 = smul.addr %s793, 4
        %s1579 = scalar_lea.vmem [#allocation13], %s1578
        %v1580 = vld [vmem:[%s1579] sm:$0xf]
        %v1581 = vld [vmem:[%s1579 + $0x4] sm:$0xf]
        %v1582 = vld [vmem:[%s1579 + $0x8] sm:$0xf]
        %v1583 = vld [vmem:[%s1579 + $0xc] sm:$0xf]
        %s1584 = scalar_lea.vmem [#allocation14], %s45
        %v1585 = vld [vmem:[%s1584] sm:$0x1]
        %v1587 = vlaneseq
        %v1588 = vshrl.u32 %v1587, 7
        %v1589 = vsub.s32 0, %v1588
        %v1590 = vrot.slane %v1585, %v1589
        %v1596 = vunpack.c.l.b16 %v1580
        %v1597 = vunpack.c.l.b16 %v1581
        %v1598 = vunpack.c.l.b16 %v1582
        %v1599 = vunpack.c.l.b16 %v1583
        %v1600 = vpack.c.b16 %v1597, %v1596
        %v1601 = vpack.c.b16 %v1599, %v1598
        %v1604 = vsel %vm732, %v1575, 0
        %v1606 = vsel %vm732, %v1577, 0
        %1608 = vmatprep.subr.bf16.mxu0 0
        %1609 = vmatpush1.bf16.msra.mxu0 %v1600
        %1610 = vmatprep.subr.bf16.mxu0 0
        %1611 = vmatpush1.bf16.msra.mxu0 %v1601
        %1612 = vmatprep.subr.bf16.mxu0 0
        %1613 = vmatpush1.bf16.msra.mxu0 0
        %1614 = vmatprep.subr.bf16.mxu0 0
        %1615 = vmatpush1.bf16.msra.mxu0 0
        %1616 = vmatprep.subr.bf16.mxu0 0
        %1617 = vmatpush1.bf16.msra.mxu0 0
        %1618 = vmatprep.subr.bf16.mxu0 0
        %1619 = vmatpush1.bf16.msra.mxu0 0
        %1620 = vmatprep.subr.bf16.mxu0 0
        %1621 = vmatpush1.bf16.msra.mxu0 0
        %1622 = vmatprep.subr.bf16.mxu0 0
        %1623 = vmatpush1.bf16.msra.mxu0 0
        %1624 = vmatprep.subr.bf16.mxu0 0
        %1625 = vmatpush1.bf16.msra.mxu0 0
        %1626 = vmatprep.subr.bf16.mxu0 0
        %1627 = vmatpush1.bf16.msra.mxu0 0
        %1628 = vmatprep.subr.bf16.mxu0 0
        %1629 = vmatpush1.bf16.msra.mxu0 0
        %1630 = vmatprep.subr.bf16.mxu0 0
        %1631 = vmatpush1.bf16.msra.mxu0 0
        %1632 = vmatprep.subr.bf16.mxu0 0
        %1633 = vmatpush1.bf16.msra.mxu0 0
        %1634 = vmatprep.subr.bf16.mxu0 0
        %1635 = vmatpush1.bf16.msra.mxu0 0
        %1636 = vmatprep.subr.bf16.mxu0 0
        %1637 = vmatpush1.bf16.msra.mxu0 0
        %1638 = vmatprep.subr.bf16.mxu0 0
        %1639 = vmatpush1.bf16.msra.mxu0 0
        %1640 = vmatprep.mubr.bf16.mxu0 0
        %1641 = vmatmul.mubr.bf16.gmra.mrb[0].mxu0 %v1604
        %v1642 = vpop.f32.mrb[0].mxu0
        %v1643 = vadd.f32 %v1590, %v1642
        %v1644 = vpop.f32.mrb[0].mxu0
        %v1645 = vpop.f32.mrb[0].mxu0
        %v1646 = vadd.f32 %v1590, %v1645
        %v1647 = vpop.f32.mrb[0].mxu0
        %1648 = vmatprep.mubr.bf16.mxu0 0
        %1649 = vmatmul.mubr.bf16.gmra.mrb[0].mxu0 %v1606
        %v1650 = vpop.f32.mrb[0].mxu0
        %v1651 = vadd.f32 %v1590, %v1650
        %v1652 = vpop.f32.mrb[0].mxu0
        %v1653 = vpop.f32.mrb[0].mxu0
        %v1654 = vpop.f32.mrb[0].mxu0
        %1655 = vdwg.mxu0
        %v1656 = vadd.f32 %v718, %v1643
        %v1657 = vadd.f32 %v719, %v1646
        %v1658 = vadd.f32 %v720, %v1651
        %s1659 = scalar_lea.vmem [#allocation16], %s45
        %v1660 = vld [vmem:[%s1659] sm:$0x1]
        %s1661 = scalar_lea.vmem [#allocation17], %s45
        %v1662 = vld [vmem:[%s1661] sm:$0x1]
        %v1663 = vsel %vm732, %v1656, 0.0
        %1664 = vadd.xlane.f32.xlu0 %v1663
        %v1665 = vpop.xlane.xlu0 %1664
        %v1666 = vsel %vm732, %v1657, 0.0
        %1667 = vadd.xlane.f32.xlu0 %v1666
        %v1668 = vpop.xlane.xlu0 %1667
        %v1669 = vsel %vm732, %v1658, 0.0
        %1670 = vadd.xlane.f32.xlu0 %v1669
        %v1671 = vpop.xlane.xlu0 %1670
        %v1672 = vmul.f32 %v1665, %v742
        %v1673 = vmul.f32 %v1668, %v742
        %v1674 = vmul.f32 %v1671, %v742
        %v1675 = vsub.f32 %v1656, %v1672
        %v1676 = vsub.f32 %v1657, %v1673
        %v1677 = vsub.f32 %v1658, %v1674
        %v1678 = vmul.f32 %v1675, %v1675
        %v1679 = vmul.f32 %v1676, %v1676
        %v1680 = vmul.f32 %v1677, %v1677
        %v1681 = vsel %vm732, %v1678, 0.0
        %1682 = vadd.xlane.f32.xlu0 %v1681
        %v1683 = vpop.xlane.xlu0 %1682
        %v1684 = vsel %vm732, %v1679, 0.0
        %1685 = vadd.xlane.f32.xlu0 %v1684
        %v1686 = vpop.xlane.xlu0 %1685
        %v1687 = vsel %vm732, %v1680, 0.0
        %1688 = vadd.xlane.f32.xlu0 %v1687
        %v1689 = vpop.xlane.xlu0 %1688
        %v1690 = vmul.f32 %v1683, %v742
        %v1691 = vmul.f32 %v1686, %v742
        %v1692 = vmul.f32 %v1689, %v742
        %v1693 = vadd.f32 %v1690, 1e-05
        %v1694 = vadd.f32 %v1691, 1e-05
        %v1695 = vadd.f32 %v1692, 1e-05
        %v1696 = vrsqrt.pop %v1693
        %v1697 = vrsqrt.pop %v1694
        %v1698 = vrsqrt.pop %v1695
        %v1699 = vmul.f32 %v1675, %v1696
        %v1700 = vmul.f32 %v1676, %v1697
        %v1701 = vmul.f32 %v1677, %v1698
        %v1703 = vlaneseq
        %v1704 = vshrl.u32 %v1703, 7
        %v1705 = vsub.s32 0, %v1704
        %v1706 = vrot.slane %v1660, %v1705
        %v1708 = vmul.f32 %v1699, %v1706
        %v1709 = vmul.f32 %v1700, %v1706
        %v1710 = vmul.f32 %v1701, %v1706
        %v1712 = vlaneseq
        %v1713 = vshrl.u32 %v1712, 7
        %v1714 = vsub.s32 0, %v1713
        %v1715 = vrot.slane %v1662, %v1714
        %v1717 = vadd.f32 %v1708, %v1715
        %v1718 = vadd.f32 %v1709, %v1715
        %v1719 = vadd.f32 %v1710, %v1715
        %v1720 = vpack.c.bf16 %v1718, %v1717
        %v1721 = vpack.c.bf16 %v1719, %v1719
        %s1722 = smul.addr %s793, 4
        %s1723 = scalar_lea.vmem [#allocation19], %s1722
        %v1724 = vld [vmem:[%s1723] sm:$0xf]
        %v1725 = vld [vmem:[%s1723 + $0x4] sm:$0xf]
        %v1726 = vld [vmem:[%s1723 + $0x8] sm:$0xf]
        %v1727 = vld [vmem:[%s1723 + $0xc] sm:$0xf]
        %s1728 = scalar_lea.vmem [#allocation20], %s45
        %v1729 = vld [vmem:[%s1728] sm:$0x1]
        %v1731 = vlaneseq
        %v1732 = vshrl.u32 %v1731, 7
        %v1733 = vsub.s32 0, %v1732
        %v1734 = vrot.slane %v1729, %v1733
        %v1740 = vunpack.c.l.b16 %v1724
        %v1741 = vunpack.c.l.b16 %v1725
        %v1742 = vunpack.c.l.b16 %v1726
        %v1743 = vunpack.c.l.b16 %v1727
        %v1744 = vpack.c.b16 %v1741, %v1740
        %v1745 = vpack.c.b16 %v1743, %v1742
        %v1749 = vsel %vm732, %v1720, 0
        %v1752 = vsel %vm732, %v1721, 0
        %1754 = vmatprep.subr.bf16.mxu0 0
        %1755 = vmatpush1.bf16.msra.mxu0 %v1744
        %1756 = vmatprep.subr.bf16.mxu0 0
        %1757 = vmatpush1.bf16.msra.mxu0 %v1745
        %1758 = vmatprep.subr.bf16.mxu0 0
        %1759 = vmatpush1.bf16.msra.mxu0 0
        %1760 = vmatprep.subr.bf16.mxu0 0
        %1761 = vmatpush1.bf16.msra.mxu0 0
        %1762 = vmatprep.subr.bf16.mxu0 0
        %1763 = vmatpush1.bf16.msra.mxu0 0
        %1764 = vmatprep.subr.bf16.mxu0 0
        %1765 = vmatpush1.bf16.msra.mxu0 0
        %1766 = vmatprep.subr.bf16.mxu0 0
        %1767 = vmatpush1.bf16.msra.mxu0 0
        %1768 = vmatprep.subr.bf16.mxu0 0
        %1769 = vmatpush1.bf16.msra.mxu0 0
        %1770 = vmatprep.subr.bf16.mxu0 0
        %1771 = vmatpush1.bf16.msra.mxu0 0
        %1772 = vmatprep.subr.bf16.mxu0 0
        %1773 = vmatpush1.bf16.msra.mxu0 0
        %1774 = vmatprep.subr.bf16.mxu0 0
        %1775 = vmatpush1.bf16.msra.mxu0 0
        %1776 = vmatprep.subr.bf16.mxu0 0
        %1777 = vmatpush1.bf16.msra.mxu0 0
        %1778 = vmatprep.subr.bf16.mxu0 0
        %1779 = vmatpush1.bf16.msra.mxu0 0
        %1780 = vmatprep.subr.bf16.mxu0 0
        %1781 = vmatpush1.bf16.msra.mxu0 0
        %1782 = vmatprep.subr.bf16.mxu0 0
        %1783 = vmatpush1.bf16.msra.mxu0 0
        %1784 = vmatprep.subr.bf16.mxu0 0
        %1785 = vmatpush1.bf16.msra.mxu0 0
        %1786 = vmatprep.mubr.bf16.mxu0 0
        %1787 = vmatmul.mubr.bf16.gmra.mrb[0].mxu0 %v1749
        %v1788 = vpop.f32.mrb[0].mxu0
        %v1789 = vadd.f32 %v1734, %v1788
        %v1790 = vpop.f32.mrb[0].mxu0
        %v1791 = vpop.f32.mrb[0].mxu0
        %v1792 = vadd.f32 %v1734, %v1791
        %v1793 = vpop.f32.mrb[0].mxu0
        %1794 = vmatprep.mubr.bf16.mxu0 0
        %1795 = vmatmul.mubr.bf16.gmra.mrb[0].mxu0 %v1752
        %v1796 = vpop.f32.mrb[0].mxu0
        %v1797 = vadd.f32 %v1734, %v1796
        %v1798 = vpop.f32.mrb[0].mxu0
        %v1799 = vpop.f32.mrb[0].mxu0
        %v1800 = vpop.f32.mrb[0].mxu0
        %1801 = vdwg.mxu0
        %v1802 = vmul.f32 %v1789, 0.5
        %v1803 = vmul.f32 %v1792, 0.5
        %v1804 = vmul.f32 %v1797, 0.5
        %v1805 = vmul.f32 %v1789, 0.044715
        %v1806 = vmul.f32 %v1792, 0.044715
        %v1807 = vmul.f32 %v1797, 0.044715
        %v1808 = vmul.f32 %v1805, %v1789
        %v1809 = vmul.f32 %v1806, %v1792
        %v1810 = vmul.f32 %v1807, %v1797
        %v1811 = vmul.f32 %v1808, %v1789
        %v1812 = vmul.f32 %v1809, %v1792
        %v1813 = vmul.f32 %v1810, %v1797
        %v1814 = vadd.f32 %v1789, %v1811
        %v1815 = vadd.f32 %v1792, %v1812
        %v1816 = vadd.f32 %v1797, %v1813
        %v1817 = vmul.f32 %v1814, 0.7978846
        %v1818 = vmul.f32 %v1815, 0.7978846
        %v1819 = vmul.f32 %v1816, 0.7978846
        %v1820 = vtanh.pop %v1817
        %v1821 = vtanh.pop %v1818
        %v1822 = vtanh.pop %v1819
        %v1823 = vadd.f32 %v1820, 1.0
        %v1824 = vadd.f32 %v1821, 1.0
        %v1825 = vadd.f32 %v1822, 1.0
        %v1826 = vmul.f32 %v1802, %v1823
        %v1827 = vmul.f32 %v1803, %v1824
        %v1828 = vmul.f32 %v1804, %v1825
        %v1829 = vpack.c.bf16 %v1827, %v1826
        %v1830 = vpack.c.bf16 %v1828, %v1828
        %s1831 = smul.u32 %s45, 16
        %s1832 = smul.addr %s1831, 4
        %s1833 = scalar_lea.vmem [#allocation22], %s1832
        %v1834 = vld [vmem:[%s1833] sm:$0xf]
        %v1835 = vld [vmem:[%s1833 + $0x4] sm:$0xf]
        %v1836 = vld [vmem:[%s1833 + $0x8] sm:$0xf]
        %v1837 = vld [vmem:[%s1833 + $0xc] sm:$0xf]
        %v1838 = vld [vmem:[%s1833 + $0x10] sm:$0xf]
        %v1839 = vld [vmem:[%s1833 + $0x14] sm:$0xf]
        %v1840 = vld [vmem:[%s1833 + $0x18] sm:$0xf]
        %v1841 = vld [vmem:[%s1833 + $0x1c] sm:$0xf]
        %v1842 = vld [vmem:[%s1833 + $0x20] sm:$0xf]
        %v1843 = vld [vmem:[%s1833 + $0x24] sm:$0xf]
        %v1844 = vld [vmem:[%s1833 + $0x28] sm:$0xf]
        %v1845 = vld [vmem:[%s1833 + $0x2c] sm:$0xf]
        %v1846 = vld [vmem:[%s1833 + $0x30] sm:$0xf]
        %v1847 = vld [vmem:[%s1833 + $0x34] sm:$0xf]
        %v1848 = vld [vmem:[%s1833 + $0x38] sm:$0xf]
        %v1849 = vld [vmem:[%s1833 + $0x3c] sm:$0xf]
        %s1850 = scalar_lea.vmem [#allocation23], %s45
        %v1851 = vld [vmem:[%s1850] sm:$0x1]
        %v1853 = vlaneseq
        %v1854 = vshrl.u32 %v1853, 7
        %v1855 = vsub.s32 0, %v1854
        %v1856 = vrot.slane %v1851, %v1855
        %v1874 = vunpack.c.l.b16 %v1834
        %v1875 = vunpack.c.l.b16 %v1835
        %v1876 = vunpack.c.l.b16 %v1836
        %v1877 = vunpack.c.l.b16 %v1837
        %v1878 = vunpack.c.l.b16 %v1838
        %v1879 = vunpack.c.l.b16 %v1839
        %v1880 = vunpack.c.l.b16 %v1840
        %v1881 = vunpack.c.l.b16 %v1841
        %v1882 = vunpack.c.l.b16 %v1842
        %v1883 = vunpack.c.l.b16 %v1843
        %v1884 = vunpack.c.l.b16 %v1844
        %v1885 = vunpack.c.l.b16 %v1845
        %v1886 = vunpack.c.l.b16 %v1846
        %v1887 = vunpack.c.l.b16 %v1847
        %v1888 = vunpack.c.l.b16 %v1848
        %v1889 = vunpack.c.l.b16 %v1849
        %v1890 = vpack.c.b16 %v1875, %v1874
        %v1891 = vpack.c.b16 %v1877, %v1876
        %v1892 = vpack.c.b16 %v1879, %v1878
        %v1893 = vpack.c.b16 %v1881, %v1880
        %v1894 = vpack.c.b16 %v1883, %v1882
        %v1895 = vpack.c.b16 %v1885, %v1884
        %v1896 = vpack.c.b16 %v1887, %v1886
        %v1897 = vpack.c.b16 %v1889, %v1888
        %1906 = vmatprep.subr.bf16.mxu0 0
        %1907 = vmatpush1.bf16.msra.mxu0 %v1890
        %1908 = vmatprep.subr.bf16.mxu0 0
        %1909 = vmatpush1.bf16.msra.mxu0 %v1891
        %1910 = vmatprep.subr.bf16.mxu0 0
        %1911 = vmatpush1.bf16.msra.mxu0 %v1892
        %1912 = vmatprep.subr.bf16.mxu0 0
        %1913 = vmatpush1.bf16.msra.mxu0 %v1893
        %1914 = vmatprep.subr.bf16.mxu0 0
        %1915 = vmatpush1.bf16.msra.mxu0 %v1894
        %1916 = vmatprep.subr.bf16.mxu0 0
        %1917 = vmatpush1.bf16.msra.mxu0 %v1895
        %1918 = vmatprep.subr.bf16.mxu0 0
        %1919 = vmatpush1.bf16.msra.mxu0 %v1896
        %1920 = vmatprep.subr.bf16.mxu0 0
        %1921 = vmatpush1.bf16.msra.mxu0 %v1897
        %1922 = vmatprep.subr.bf16.mxu0 0
        %1923 = vmatpush1.bf16.msra.mxu0 0
        %1924 = vmatprep.subr.bf16.mxu0 0
        %1925 = vmatpush1.bf16.msra.mxu0 0
        %1926 = vmatprep.subr.bf16.mxu0 0
        %1927 = vmatpush1.bf16.msra.mxu0 0
        %1928 = vmatprep.subr.bf16.mxu0 0
        %1929 = vmatpush1.bf16.msra.mxu0 0
        %1930 = vmatprep.subr.bf16.mxu0 0
        %1931 = vmatpush1.bf16.msra.mxu0 0
        %1932 = vmatprep.subr.bf16.mxu0 0
        %1933 = vmatpush1.bf16.msra.mxu0 0
        %1934 = vmatprep.subr.bf16.mxu0 0
        %1935 = vmatpush1.bf16.msra.mxu0 0
        %1936 = vmatprep.subr.bf16.mxu0 0
        %1937 = vmatpush1.bf16.msra.mxu0 0
        %1938 = vmatprep.mubr.bf16.mxu0 0
        %1939 = vmatmul.mubr.bf16.gmra.mrb[0].mxu0 %v1829
        %v1940 = vpop.f32.mrb[0].mxu0
        %v1941 = vadd.f32 %v1856, %v1940
        %v1942 = vpop.f32.mrb[0].mxu0
        %v1943 = vpop.f32.mrb[0].mxu0
        %v1944 = vadd.f32 %v1856, %v1943
        %v1945 = vpop.f32.mrb[0].mxu0
        %1946 = vmatprep.mubr.bf16.mxu0 0
        %1947 = vmatmul.mubr.bf16.gmra.mrb[0].mxu0 %v1830
        %v1948 = vpop.f32.mrb[0].mxu0
        %v1949 = vadd.f32 %v1856, %v1948
        %v1950 = vpop.f32.mrb[0].mxu0
        %v1951 = vpop.f32.mrb[0].mxu0
        %v1952 = vpop.f32.mrb[0].mxu0
        %1953 = vdwg.mxu0
        %v1954 = vadd.f32 %v1656, %v1941
        %v1955 = vadd.f32 %v1657, %v1944
        %v1956 = vadd.f32 %v1658, %v1949
        %1957 = vst.msk [vmem:[%s705] sm:$0xff] %vm732, %v1954
        %1958 = vst.msk [vmem:[%s705 + $0x8] sm:$0xff] %vm732, %v1955
        %1959 = vst.msk [vmem:[%s705 + $0x10] sm:$0xff] %vm732, %v1956
        %s1960 = sand.u32 %s364, 1
        %s1961 = scalar_lea.sflag [#allocation4], %s1960
        %s1962 = sand.u32 %s364, 1
        %s1963 = smul.addr %s1962, 24
        %s1964 = scalar_lea.vmem [#allocation25], %s1963
        // Predicated region
        $region137: #{tpu_custom_call.1} parent=75 // pred_check
          %p1965 = pneg %p374
        $region138: #{tpu_custom_call.1} parent=75 // pred_check_branch
          %1967 = sbr.rel (%p1965) target = $region140
        $region139: #{tpu_custom_call.1} parent=75 // pred_region
          %s1969 = ssub.s32 384, 384
          %1970 = vsyncadd %s1961, %s1969
          %s1971 = smul.addr %s44, 3
          %s1972 = smul.addr %s1971, 128
          %s1973 = scalar_lea.hbm %s14, %s1972
          %s1974 = sshll.u32 %s1964, 4
          %s1975 = int_to_ptr.vmem [resolvable:$true] %s1974
          %1980 = dma.vmem_to_hbm [thread:$0]  %s1975, 384, %s1973, %s1961, 128, 128, 8
        $region140: #{tpu_custom_call.1} parent=75 // pred_fallthru
          _
      $region76: #{tpu_custom_call.1} parent=5 // pred_fallthru
        _
      %p1981 = scmp.le.s32.totalorder 2, %s35
      // Predicated region
      $region141: #{tpu_custom_call.1} parent=5 // pred_check
        %p1982 = pneg %p1981
      $region142: #{tpu_custom_call.1} parent=5 // pred_check_branch
        %1984 = sbr.rel (%p1982) target = $region144
      $region143: #{tpu_custom_call.1} parent=5 // pred_region
        %s1985 = ssub.s32 %s35, 2
        // Predicated region
        $region145: #{tpu_custom_call.1} parent=143 // pred_check
          %p1986 = pneg %p380
        $region146: #{tpu_custom_call.1} parent=143 // pred_check_branch
          %1988 = sbr.rel (%p1986) target = $region148
        $region147: #{tpu_custom_call.1} parent=143 // pred_region
          %s1989 = sand.u32 %s365, 1
          %s1990 = scalar_lea.sflag [#allocation4], %s1989
          %s1991 = sand.u32 %s365, 1
          %s1992 = smul.addr %s1991, 24
          %s1993 = scalar_lea.vmem [#allocation25], %s1992
          %1994 = dma.done %s1990, 384
        $region148: #{tpu_custom_call.1} parent=143 // pred_fallthru
          _
      $region144: #{tpu_custom_call.1} parent=5 // pred_fallthru
        _
    $region6: #{tpu_custom_call.1} parent=1 // loop_footer
      %s39 = sadd.s32 1, %s35
    $region7: #{tpu_custom_call.1} parent=1 // loop_footer_branch
      %34 = sbr.rel target = $region3
    $region8: #{tpu_custom_call.1} parent=1 // loop_exit
      _
    %1995 = vsyncpa [#allocation3], 1
    %s1996 = scalar_lea.sflag [#allocation3], 1
    %1997 = vsyncpa %s1996, 1
    %1998 = vsyncpa [#allocation6], 1
    %s1999 = scalar_lea.sflag [#allocation6], 1
    %2000 = vsyncpa %s1999, 1
    %2001 = vsyncpa [#allocation9], 1
    %2002 = vsyncpa [#allocation12], 1
    %2003 = vsyncpa [#allocation15], 1
    %2004 = vsyncpa [#allocation18], 1
    %2005 = vsyncpa [#allocation21], 1
    %2006 = vsyncpa [#allocation24], 1
    %2007 = vsyncpa [#allocation4], 1
    %s2008 = scalar_lea.sflag [#allocation4], 1
    %2009 = vsyncpa %s2008, 1

</llo_original>
